<compile_context>
chip_gen: v5e
topology: v5e:2x2
jax: 0.10.0
libtpu: 0.0.40
codegen_flags: <defaults>
</compile_context>

<pallas_src>
import functools

import jax
import jax.numpy as jnp
from jax.experimental import pallas as pl
from jax.experimental.pallas import tpu as pltpu


# ----------------------------------------------------------------------------
# Kernel
# ----------------------------------------------------------------------------
def model_kernel(img_ref, meta_ref,
                 msel_ref, csel_ref,
                 wfc_ref, bfc_ref,
                 w1_ref, b1_ref, s1_ref, t1_ref,
                 w2_ref, b2_ref, s2_ref, t2_ref,
                 wo_cnn_ref, wo_meta_ref, bo_ref,
                 out_ref, acc_ref, *, true_s, mask_tail):
    si = pl.program_id(1)

    # ---- init GAP accumulator at the first spatial chunk ----
    @pl.when(si == 0)
    def _():
        acc_ref[...] = jnp.zeros_like(acc_ref)

    # ---- streaming GAP: f32 image chunk (bm*C, chunk), f32 partial sums ----
    x = img_ref[...]                                           # (bm*C, chunk)
    if mask_tail:
        # last spatial block may extend past S: zero the out-of-bounds lanes
        col = si * x.shape[1] + jax.lax.broadcasted_iota(jnp.int32, x.shape, 1)
        x = jnp.where(col < true_s, x, 0.0)
    acc_ref[...] += jnp.sum(x, axis=1, keepdims=True)          # (bm*C, 1)

    # ---- finalize: backbone FC, meta MLP, output head ----
    @pl.when(si == pl.num_programs(1) - 1)
    def _():
        # Un-flatten (bm*C, 1) row sums into (bm, C) pooled means via two tiny
        # constant matrices (csel already carries the 1/S factor); avoids any
        # in-kernel reshape / relayout.
        pooled = jnp.dot(msel_ref[...], acc_ref[...] * csel_ref[...],
                         preferred_element_type=jnp.float32)              # (bm, C)
        cnn = jnp.dot(pooled, wfc_ref[...],
                      preferred_element_type=jnp.float32) + bfc_ref[...]   # (bm, F)

        m = meta_ref[...]                                                  # (bm, Pm)
        h1 = jnp.dot(m, w1_ref[...],
                     preferred_element_type=jnp.float32) + b1_ref[...]     # (bm, 512)
        h1 = jnp.maximum(h1 * s1_ref[...] + t1_ref[...], 0.0)              # BN + ReLU
        h2 = jnp.dot(h1, w2_ref[...],
                     preferred_element_type=jnp.float32) + b2_ref[...]     # (bm, 256)
        h2 = jnp.maximum(h2 * s2_ref[...] + t2_ref[...], 0.0)              # BN + ReLU

        # concat + single matmul split into two matmuls; head padded to 128
        # output lanes so the store is unmasked / lane-dense.
        out = (jnp.dot(cnn, wo_cnn_ref[...], preferred_element_type=jnp.float32)
               + jnp.dot(h2, wo_meta_ref[...], preferred_element_type=jnp.float32)
               + bo_ref[...])                                              # (bm, 128)
        out_ref[...] = out


# ----------------------------------------------------------------------------
# Wrapper
# ----------------------------------------------------------------------------
def _round_up(x, m):
    return ((x + m - 1) // m) * m


def _pad_to(x, rows=None, cols=None):
    r = 0 if rows is None else rows - x.shape[0]
    c = 0 if cols is None else cols - x.shape[1]
    if r == 0 and c == 0:
        return x
    return jnp.pad(x, ((0, r), (0, c)))


def _pick_batch_block(B):
    """>=2 batch blocks when B >= 16 (v7x megacore), bm multiple of 8, bm | B."""
    if B >= 16:
        cands = [bm for bm in range(8, min(128, B // 2) + 1, 8) if B % bm == 0]
        if cands:
            return cands[-1]
    return B


def _pick_spatial_chunk(S, bmC, target_bytes=4 * 1024 * 1024):
    """~4 MiB f32 tiles (sublane-dense layout); prefer a chunk dividing S."""
    max_chunk = max(128, (target_bytes // max(1, bmC * 4)) // 128 * 128)
    if S <= max_chunk:
        return _round_up(S, 128)                 # single spatial step
    c = max_chunk
    while c >= max(128, max_chunk // 2):         # divisor of S near the target?
        if S % c == 0:
            return c
        c -= 128
    return max_chunk                             # tail handled by in-kernel mask


def model_forward(img, meta, params, *, spatial_chunk=None):
    """img: (B, C, H, W); meta: (B, num_metas). Returns (B, 1) f32."""
    B, C, H, W = img.shape
    S = H * W
    Pm = meta.shape[1]
    F = params["w_fc"].shape[1]

    # Stream the image in f32 directly (no extra wrapper-side dtype-convert
    # pass over HBM). The (B*C, S) view is a contiguous dim-merge (no copy).
    img2d = img.reshape(B * C, S)
    if img2d.dtype != jnp.float32:
        img2d = img2d.astype(jnp.float32)
    meta_f32 = meta.astype(jnp.float32)

    # Batch blocking (leading "parallel" grid axis -> megacore on v7x).
    bm = _pick_batch_block(B)
    b_blocks = B // bm
    bmC = bm * C

    if spatial_chunk is None or spatial_chunk % 128 != 0:
        spatial_chunk = _pick_spatial_chunk(S, bmC)
    s_blocks = pl.cdiv(S, spatial_chunk)
    mask_tail = (S % spatial_chunk) != 0

    # ---- fold BatchNorm1d (eval) into scale/shift:  y = x*scale + shift ----
    eps = 1e-5

    def bn_fold(gamma, beta, mean, var):
        scale = gamma / jnp.sqrt(var + eps)
        shift = beta - mean * scale
        return scale.reshape(1, -1), shift.reshape(1, -1)

    s1, t1 = bn_fold(params["bn1_g"], params["bn1_b"],
                     params["bn1_m"], params["bn1_v"])
    s2, t2 = bn_fold(params["bn2_g"], params["bn2_b"],
                     params["bn2_m"], params["bn2_v"])

    # ---- lane padding: 500->512, 250->256, head -> 128 output lanes --------
    h1_raw = params["w1"].shape[1]
    h2_raw = params["w2"].shape[1]
    H1 = _round_up(h1_raw, 128)            # 512
    H2 = _round_up(h2_raw, 128)            # 256
    NOUT = 128

    w1 = _pad_to(params["w1"], cols=H1)
    b1 = _pad_to(params["b1"].reshape(1, -1), cols=H1)
    s1 = _pad_to(s1, cols=H1)              # padded scale/shift = 0 -> ReLU(0) = 0
    t1 = _pad_to(t1, cols=H1)
    w2 = _pad_to(params["w2"], rows=H1, cols=H2)   # padded rows/cols = 0
    b2 = _pad_to(params["b2"].reshape(1, -1), cols=H2)
    s2 = _pad_to(s2, cols=H2)
    t2 = _pad_to(t2, cols=H2)

    w_out = params["w_out"]                              # (F + h2_raw, 1)
    wo_cnn = _pad_to(w_out[:F, :], cols=NOUT)            # (F, 128)
    wo_meta = _pad_to(w_out[F:, :], rows=H2, cols=NOUT)  # (256, 128)
    b_out = _pad_to(params["b_out"].reshape(1, -1), cols=NOUT)

    w_fc = params["w_fc"]
    b_fc = params["b_fc"].reshape(1, -1)

    # Selector constants: un-flatten (bm*C,) row-sums -> (bm, C) pooled means.
    #   msel[b, k] = 1 iff k // C == b ;  csel[k, c] = (k % C == c) / S
    msel = jnp.kron(jnp.eye(bm, dtype=jnp.float32),
                    jnp.ones((1, C), jnp.float32))               # (bm, bm*C)
    csel = jnp.tile(jnp.eye(C, dtype=jnp.float32), (bm, 1)) / float(S)  # (bm*C, C)

    inputs = (img2d, meta_f32,
              msel, csel,
              w_fc, b_fc,
              w1, b1, s1, t1,
              w2, b2, s2, t2,
              wo_cnn, wo_meta, b_out)

    # Resident weights/constants: constant index maps -> DMA'd once, in VMEM.
    def const_spec(arr):
        return pl.BlockSpec(arr.shape, lambda bi, si: (0, 0))

    in_specs = [
        pl.BlockSpec((bmC, spatial_chunk), lambda bi, si: (bi, si)),   # image
        pl.BlockSpec((bm, Pm), lambda bi, si: (bi, 0)),                # meta
    ] + [const_spec(a) for a in inputs[2:]]

    out_specs = pl.BlockSpec((bm, NOUT), lambda bi, si: (bi, 0))

    # Advisory cost estimate: this is essentially a pure HBM-bandwidth op.
    flops = int(B * C * S
                + 2 * B * (C * F + Pm * H1 + H1 * H2 + (F + H2) * NOUT))
    weight_bytes = sum(int(a.size) * a.dtype.itemsize for a in inputs[2:])
    bytes_accessed = (int(img2d.size) * 4 + int(meta_f32.size) * 4
                      + weight_bytes + B * NOUT * 4)
    cost = pl.CostEstimate(flops=flops, transcendentals=0,
                           bytes_accessed=bytes_accessed)

    kernel = functools.partial(model_kernel, true_s=S, mask_tail=mask_tail)

    out_full = pl.pallas_call(
        kernel,
        out_shape=jax.ShapeDtypeStruct((B, NOUT), jnp.float32),
        grid_spec=pltpu.PrefetchScalarGridSpec(
            num_scalar_prefetch=0,
            grid=(b_blocks, s_blocks),
            in_specs=in_specs,
            out_specs=out_specs,
            scratch_shapes=[pltpu.VMEM((bmC, 1), jnp.float32)],   # GAP accumulator
        ),
        compiler_params=pltpu.CompilerParams(
            dimension_semantics=("parallel", "arbitrary"),
            # 2 x ~4 MiB sublane-dense image buffers + a few MiB of resident
            # weights; fits v7x's 64 MiB/TC with headroom, trivial on v5e/v6e.
            vmem_limit_bytes=48 * 1024 * 1024,
        ),
        cost_estimate=cost,
    )(*inputs)

    return out_full[:, :1]


# ----------------------------------------------------------------------------
# Params + reference (for a correctness spot-check)
# ----------------------------------------------------------------------------
def init_params(key, num_channels, num_metas, fc_out):
    ks = jax.random.split(key, 12)
    f32 = jnp.float32

    def dense(k, fan_in, fan_out):
        return jax.random.normal(k, (fan_in, fan_out), f32) * (1.0 / jnp.sqrt(fan_in))

    return {
        # synthetic backbone "arch": GAP -> Linear(C, fc_out)
        "w_fc": dense(ks[0], num_channels, fc_out),
        "b_fc": jax.random.normal(ks[1], (fc_out,), f32) * 0.01,
        # meta MLP
        "w1": dense(ks[2], num_metas, 500),
        "b1": jax.random.normal(ks[3], (500,), f32) * 0.01,
        "bn1_g": 1.0 + 0.1 * jax.random.normal(ks[4], (500,), f32),
        "bn1_b": 0.1 * jax.random.normal(ks[5], (500,), f32),
        "bn1_m": 0.05 * jax.random.normal(ks[6], (500,), f32),
        "bn1_v": 1.0 + 0.1 * jnp.abs(jax.random.normal(ks[7], (500,), f32)),
        "w2": dense(ks[8], 500, 250),
        "b2": jax.random.normal(ks[9], (250,), f32) * 0.01,
        "bn2_g": jnp.ones((250,), f32),
        "bn2_b": jnp.zeros((250,), f32),
        "bn2_m": jnp.zeros((250,), f32),
        "bn2_v": jnp.ones((250,), f32),
        # output head Linear(fc_out + 250, 1)
        "w_out": dense(ks[10], fc_out + 250, 1),
        "b_out": jax.random.normal(ks[11], (1,), f32) * 0.01,
    }


def reference_forward(img, meta, params):
    B, C, H, W = img.shape
    eps = 1e-5
    pooled = img.reshape(B, C, H * W).mean(axis=2)
    cnn = pooled @ params["w_fc"] + params["b_fc"]

    def bn(x, g, b, m, v):
        return (x - m) / jnp.sqrt(v + eps) * g + b

    h1 = jnp.maximum(bn(meta @ params["w1"] + params["b1"],
                        params["bn1_g"], params["bn1_b"],
                        params["bn1_m"], params["bn1_v"]), 0.0)
    h2 = jnp.maximum(bn(h1 @ params["w2"] + params["b2"],
                        params["bn2_g"], params["bn2_b"],
                        params["bn2_m"], params["bn2_v"]), 0.0)
    feats = jnp.concatenate([cnn, h2], axis=1)
    return feats @ params["w_out"] + params["b_out"]


if __name__ == "__main__":
    root = jax.random.PRNGKey(0)
    case_keys = jax.random.split(root, 2)

    def run_case(key, B, C, H, W, num_metas, fc_out, spatial_chunk):
        k_img, k_meta, k_param = jax.random.split(key, 3)
        img = jax.random.normal(k_img, (B, C, H, W), jnp.float32)
        meta = jax.random.normal(k_meta, (B, num_metas), jnp.float32)
        params = init_params(k_param, C, num_metas, fc_out)
        out = model_forward(img, meta, params, spatial_chunk=spatial_chunk)
        jax.block_until_ready(out)
        ref = reference_forward(img, meta, params)
        assert out.shape == (B, 1) and out.dtype == jnp.float32
        assert jnp.allclose(out, ref, rtol=2e-2, atol=2e-2), (out, ref)

    # Case 1: S = 256 divisible by the 128-chunk -> 2-step spatial reduction.
    run_case(case_keys[0], B=2, C=4, H=16, W=16, num_metas=8, fc_out=32,
             spatial_chunk=128)
    # Case 2: S = 324 not divisible by 128 -> exercises the tail-mask path.
    run_case(case_keys[1], B=2, C=3, H=18, W=18, num_metas=5, fc_out=24,
             spatial_chunk=128)

    print("KERNEL_OK")
</pallas_src>

<mosaic_0001>
module attributes {stable_mosaic.version = 11 : i64} {
  func.func @model_kernel(%arg0: i32, %arg1: i32, %arg2: memref<8x128xf32, #tpu.memory_space<vmem>>, %arg3: memref<2x8xf32, #tpu.memory_space<vmem>>, %arg4: memref<2x8xf32, #tpu.memory_space<vmem>>, %arg5: memref<8x4xf32, #tpu.memory_space<vmem>>, %arg6: memref<4x32xf32, #tpu.memory_space<vmem>>, %arg7: memref<1x32xf32, #tpu.memory_space<vmem>>, %arg8: memref<8x512xf32, #tpu.memory_space<vmem>>, %arg9: memref<1x512xf32, #tpu.memory_space<vmem>>, %arg10: memref<1x512xf32, #tpu.memory_space<vmem>>, %arg11: memref<1x512xf32, #tpu.memory_space<vmem>>, %arg12: memref<512x256xf32, #tpu.memory_space<vmem>>, %arg13: memref<1x256xf32, #tpu.memory_space<vmem>>, %arg14: memref<1x256xf32, #tpu.memory_space<vmem>>, %arg15: memref<1x256xf32, #tpu.memory_space<vmem>>, %arg16: memref<32x128xf32, #tpu.memory_space<vmem>>, %arg17: memref<256x128xf32, #tpu.memory_space<vmem>>, %arg18: memref<1x128xf32, #tpu.memory_space<vmem>>, %arg19: memref<2x128xf32, #tpu.memory_space<vmem>>, %arg20: memref<8x1xf32, #tpu.memory_space<vmem>>) attributes {dimension_semantics = [#tpu.dimension_semantics<parallel>, #tpu.dimension_semantics<arbitrary>], iteration_bounds = array<i64: 1, 2>, scalar_prefetch = 0 : i64, scratch_operands = 1 : i64, tpu.core_type = #tpu.core_type<tc>, window_params = [{transform_indices = @transform_0, window_bounds = array<i64: 8, 128>}, {transform_indices = @transform_1, window_bounds = array<i64: 2, 8>}, {pipeline_mode = #tpu.pipeline_mode<synchronous>, transform_indices = @transform_2, window_bounds = array<i64: 2, 8>}, {pipeline_mode = #tpu.pipeline_mode<synchronous>, transform_indices = @transform_3, window_bounds = array<i64: 8, 4>}, {pipeline_mode = #tpu.pipeline_mode<synchronous>, transform_indices = @transform_4, window_bounds = array<i64: 4, 32>}, {pipeline_mode = #tpu.pipeline_mode<synchronous>, transform_indices = @transform_5, window_bounds = array<i64: 1, 32>}, {pipeline_mode = #tpu.pipeline_mode<synchronous>, transform_indices = @transform_6, window_bounds = array<i64: 8, 512>}, {pipeline_mode = #tpu.pipeline_mode<synchronous>, transform_indices = @transform_7, window_bounds = array<i64: 1, 512>}, {pipeline_mode = #tpu.pipeline_mode<synchronous>, transform_indices = @transform_8, window_bounds = array<i64: 1, 512>}, {pipeline_mode = #tpu.pipeline_mode<synchronous>, transform_indices = @transform_9, window_bounds = array<i64: 1, 512>}, {pipeline_mode = #tpu.pipeline_mode<synchronous>, transform_indices = @transform_10, window_bounds = array<i64: 512, 256>}, {pipeline_mode = #tpu.pipeline_mode<synchronous>, transform_indices = @transform_11, window_bounds = array<i64: 1, 256>}, {pipeline_mode = #tpu.pipeline_mode<synchronous>, transform_indices = @transform_12, window_bounds = array<i64: 1, 256>}, {pipeline_mode = #tpu.pipeline_mode<synchronous>, transform_indices = @transform_13, window_bounds = array<i64: 1, 256>}, {pipeline_mode = #tpu.pipeline_mode<synchronous>, transform_indices = @transform_14, window_bounds = array<i64: 32, 128>}, {pipeline_mode = #tpu.pipeline_mode<synchronous>, transform_indices = @transform_15, window_bounds = array<i64: 256, 128>}, {pipeline_mode = #tpu.pipeline_mode<synchronous>, transform_indices = @transform_16, window_bounds = array<i64: 1, 128>}, {transform_indices = @transform_17, window_bounds = array<i64: 2, 128>}]} {
    %c0_i32 = arith.constant 0 : i32
    %0 = arith.cmpi eq, %arg1, %c0_i32 : i32
    %1 = arith.extui %0 : i1 to i32
    %c0_i32_0 = arith.constant 0 : i32
    %2 = arith.cmpi ne, %1, %c0_i32_0 : i32
    scf.if %2 {
      %cst_7 = arith.constant 0.000000e+00 : f32
      %12 = vector.broadcast %cst_7 : f32 to vector<8x1xf32>
      %c0_8 = arith.constant 0 : index
      %c0_9 = arith.constant 0 : index
      %13 = vector.load %arg20[%c0_8, %c0_9] : memref<8x1xf32, #tpu.memory_space<vmem>>, vector<8x1xf32>
      tpu.vector_store %arg20[%c0_8, %c0_9], %12 {strides = array<i32>} : memref<8x1xf32, #tpu.memory_space<vmem>>, vector<8x1xf32>,
    } else {
    }
    %c0 = arith.constant 0 : index
    %c0_1 = arith.constant 0 : index
    %3 = vector.load %arg2[%c0, %c0_1] : memref<8x128xf32, #tpu.memory_space<vmem>>, vector<8x128xf32>
    %c0_2 = arith.constant 0 : index
    %c0_3 = arith.constant 0 : index
    %4 = vector.load %arg20[%c0_2, %c0_3] : memref<8x1xf32, #tpu.memory_space<vmem>>, vector<8x1xf32>
    %cst = arith.constant dense<0.000000e+00> : vector<8xf32>
    %5 = vector.multi_reduction <add>, %3, %cst [1] : vector<8x128xf32> to vector<8xf32>
    %6 = vector.shape_cast %5 : vector<8xf32> to vector<8x1xf32>
    %7 = arith.addf %4, %6 : vector<8x1xf32>
    %c0_4 = arith.constant 0 : index
    %c0_5 = arith.constant 0 : index
    %8 = vector.load %arg20[%c0_4, %c0_5] : memref<8x1xf32, #tpu.memory_space<vmem>>, vector<8x1xf32>
    tpu.vector_store %arg20[%c0_4, %c0_5], %7 {strides = array<i32>} : memref<8x1xf32, #tpu.memory_space<vmem>>, vector<8x1xf32>,
    %c1_i32 = arith.constant 1 : i32
    %9 = arith.cmpi eq, %arg1, %c1_i32 : i32
    %10 = arith.extui %9 : i1 to i32
    %c0_i32_6 = arith.constant 0 : i32
    %11 = arith.cmpi ne, %10, %c0_i32_6 : i32
    scf.if %11 {
      %c0_7 = arith.constant 0 : index
      %c0_8 = arith.constant 0 : index
      %12 = vector.load %arg4[%c0_7, %c0_8] : memref<2x8xf32, #tpu.memory_space<vmem>>, vector<2x8xf32>
      %c0_9 = arith.constant 0 : index
      %c0_10 = arith.constant 0 : index
      %13 = vector.load %arg20[%c0_9, %c0_10] : memref<8x1xf32, #tpu.memory_space<vmem>>, vector<8x1xf32>
      %c0_11 = arith.constant 0 : index
      %c0_12 = arith.constant 0 : index
      %14 = vector.load %arg5[%c0_11, %c0_12] : memref<8x4xf32, #tpu.memory_space<vmem>>, vector<8x4xf32>
      %15 = vector.broadcast %13 : vector<8x1xf32> to vector<8x4xf32>
      %16 = arith.mulf %15, %14 : vector<8x4xf32>
      %cst_13 = arith.constant dense<0.000000e+00> : vector<2x4xf32>
      %17 = tpu.matmul %12, %16, %cst_13 {dimension_numbers = #tpu.dot_dimension_numbers<[1], [0], [0], [1], [0, 0, 1, 1], [], []>} : vector<2x8xf32>, vector<8x4xf32>, vector<2x4xf32> -> vector<2x4xf32>
      %c0_14 = arith.constant 0 : index
      %c0_15 = arith.constant 0 : index
      %18 = vector.load %arg6[%c0_14, %c0_15] : memref<4x32xf32, #tpu.memory_space<vmem>>, vector<4x32xf32>
      %cst_16 = arith.constant dense<0.000000e+00> : vector<2x32xf32>
      %19 = tpu.matmul %17, %18, %cst_16 {dimension_numbers = #tpu.dot_dimension_numbers<[1], [0], [0], [1], [0, 0, 1, 1], [], []>} : vector<2x4xf32>, vector<4x32xf32>, vector<2x32xf32> -> vector<2x32xf32>
      %c0_17 = arith.constant 0 : index
      %c0_18 = arith.constant 0 : index
      %20 = vector.load %arg7[%c0_17, %c0_18] : memref<1x32xf32, #tpu.memory_space<vmem>>, vector<1x32xf32>
      %21 = vector.broadcast %20 : vector<1x32xf32> to vector<2x32xf32>
      %22 = arith.addf %19, %21 : vector<2x32xf32>
      %c0_19 = arith.constant 0 : index
      %c0_20 = arith.constant 0 : index
      %23 = vector.load %arg3[%c0_19, %c0_20] : memref<2x8xf32, #tpu.memory_space<vmem>>, vector<2x8xf32>
      %c0_21 = arith.constant 0 : index
      %c0_22 = arith.constant 0 : index
      %24 = vector.load %arg8[%c0_21, %c0_22] : memref<8x512xf32, #tpu.memory_space<vmem>>, vector<8x512xf32>
      %cst_23 = arith.constant dense<0.000000e+00> : vector<2x512xf32>
      %25 = tpu.matmul %23, %24, %cst_23 {dimension_numbers = #tpu.dot_dimension_numbers<[1], [0], [0], [1], [0, 0, 1, 1], [], []>} : vector<2x8xf32>, vector<8x512xf32>, vector<2x512xf32> -> vector<2x512xf32>
      %c0_24 = arith.constant 0 : index
      %c0_25 = arith.constant 0 : index
      %26 = vector.load %arg9[%c0_24, %c0_25] : memref<1x512xf32, #tpu.memory_space<vmem>>, vector<1x512xf32>
      %27 = vector.broadcast %26 : vector<1x512xf32> to vector<2x512xf32>
      %28 = arith.addf %25, %27 : vector<2x512xf32>
      %c0_26 = arith.constant 0 : index
      %c0_27 = arith.constant 0 : index
      %29 = vector.load %arg10[%c0_26, %c0_27] : memref<1x512xf32, #tpu.memory_space<vmem>>, vector<1x512xf32>
      %30 = vector.broadcast %29 : vector<1x512xf32> to vector<2x512xf32>
      %31 = arith.mulf %28, %30 : vector<2x512xf32>
      %c0_28 = arith.constant 0 : index
      %c0_29 = arith.constant 0 : index
      %32 = vector.load %arg11[%c0_28, %c0_29] : memref<1x512xf32, #tpu.memory_space<vmem>>, vector<1x512xf32>
      %33 = vector.broadcast %32 : vector<1x512xf32> to vector<2x512xf32>
      %34 = arith.addf %31, %33 : vector<2x512xf32>
      %cst_30 = arith.constant 0.000000e+00 : f32
      %35 = vector.broadcast %cst_30 : f32 to vector<2x512xf32>
      %36 = arith.maximumf %34, %35 : vector<2x512xf32>
      %c0_31 = arith.constant 0 : index
      %c0_32 = arith.constant 0 : index
      %37 = vector.load %arg12[%c0_31, %c0_32] : memref<512x256xf32, #tpu.memory_space<vmem>>, vector<512x256xf32>
      %cst_33 = arith.constant dense<0.000000e+00> : vector<2x256xf32>
      %38 = tpu.matmul %36, %37, %cst_33 {dimension_numbers = #tpu.dot_dimension_numbers<[1], [0], [0], [1], [0, 0, 1, 1], [], []>} : vector<2x512xf32>, vector<512x256xf32>, vector<2x256xf32> -> vector<2x256xf32>
      %c0_34 = arith.constant 0 : index
      %c0_35 = arith.constant 0 : index
      %39 = vector.load %arg13[%c0_34, %c0_35] : memref<1x256xf32, #tpu.memory_space<vmem>>, vector<1x256xf32>
      %40 = vector.broadcast %39 : vector<1x256xf32> to vector<2x256xf32>
      %41 = arith.addf %38, %40 : vector<2x256xf32>
      %c0_36 = arith.constant 0 : index
      %c0_37 = arith.constant 0 : index
      %42 = vector.load %arg14[%c0_36, %c0_37] : memref<1x256xf32, #tpu.memory_space<vmem>>, vector<1x256xf32>
      %43 = vector.broadcast %42 : vector<1x256xf32> to vector<2x256xf32>
      %44 = arith.mulf %41, %43 : vector<2x256xf32>
      %c0_38 = arith.constant 0 : index
      %c0_39 = arith.constant 0 : index
      %45 = vector.load %arg15[%c0_38, %c0_39] : memref<1x256xf32, #tpu.memory_space<vmem>>, vector<1x256xf32>
      %46 = vector.broadcast %45 : vector<1x256xf32> to vector<2x256xf32>
      %47 = arith.addf %44, %46 : vector<2x256xf32>
      %cst_40 = arith.constant 0.000000e+00 : f32
      %48 = vector.broadcast %cst_40 : f32 to vector<2x256xf32>
      %49 = arith.maximumf %47, %48 : vector<2x256xf32>
      %c0_41 = arith.constant 0 : index
      %c0_42 = arith.constant 0 : index
      %50 = vector.load %arg16[%c0_41, %c0_42] : memref<32x128xf32, #tpu.memory_space<vmem>>, vector<32x128xf32>
      %cst_43 = arith.constant dense<0.000000e+00> : vector<2x128xf32>
      %51 = tpu.matmul %22, %50, %cst_43 {dimension_numbers = #tpu.dot_dimension_numbers<[1], [0], [0], [1], [0, 0, 1, 1], [], []>} : vector<2x32xf32>, vector<32x128xf32>, vector<2x128xf32> -> vector<2x128xf32>
      %c0_44 = arith.constant 0 : index
      %c0_45 = arith.constant 0 : index
      %52 = vector.load %arg17[%c0_44, %c0_45] : memref<256x128xf32, #tpu.memory_space<vmem>>, vector<256x128xf32>
      %cst_46 = arith.constant dense<0.000000e+00> : vector<2x128xf32>
      %53 = tpu.matmul %49, %52, %cst_46 {dimension_numbers = #tpu.dot_dimension_numbers<[1], [0], [0], [1], [0, 0, 1, 1], [], []>} : vector<2x256xf32>, vector<256x128xf32>, vector<2x128xf32> -> vector<2x128xf32>
      %54 = arith.addf %51, %53 : vector<2x128xf32>
      %c0_47 = arith.constant 0 : index
      %c0_48 = arith.constant 0 : index
      %55 = vector.load %arg18[%c0_47, %c0_48] : memref<1x128xf32, #tpu.memory_space<vmem>>, vector<1x128xf32>
      %56 = vector.broadcast %55 : vector<1x128xf32> to vector<2x128xf32>
      %57 = arith.addf %54, %56 : vector<2x128xf32>
      %c0_49 = arith.constant 0 : index
      %c0_50 = arith.constant 0 : index
      %58 = vector.load %arg19[%c0_49, %c0_50] : memref<2x128xf32, #tpu.memory_space<vmem>>, vector<2x128xf32>
      tpu.vector_store %arg19[%c0_49, %c0_50], %57 {strides = array<i32>} : memref<2x128xf32, #tpu.memory_space<vmem>>, vector<2x128xf32>,
    } else {
    }
    return
  }
  func.func @transform_0(%arg0: i32, %arg1: i32) -> (i32, i32) {
    %c0_i32 = arith.constant 0 : i32
    return %arg0, %arg1 : i32, i32
  }
  func.func @transform_1(%arg0: i32, %arg1: i32) -> (i32, i32) {
    %c0_i32 = arith.constant 0 : i32
    %c0_i32_0 = arith.constant 0 : i32
    return %arg0, %c0_i32 : i32, i32
  }
  func.func @transform_2(%arg0: i32, %arg1: i32) -> (i32, i32) {
    %c0_i32 = arith.constant 0 : i32
    %c0_i32_0 = arith.constant 0 : i32
    %c0_i32_1 = arith.constant 0 : i32
    return %c0_i32, %c0_i32_0 : i32, i32
  }
  func.func @transform_3(%arg0: i32, %arg1: i32) -> (i32, i32) {
    %c0_i32 = arith.constant 0 : i32
    %c0_i32_0 = arith.constant 0 : i32
    %c0_i32_1 = arith.constant 0 : i32
    return %c0_i32, %c0_i32_0 : i32, i32
  }
  func.func @transform_4(%arg0: i32, %arg1: i32) -> (i32, i32) {
    %c0_i32 = arith.constant 0 : i32
    %c0_i32_0 = arith.constant 0 : i32
    %c0_i32_1 = arith.constant 0 : i32
    return %c0_i32, %c0_i32_0 : i32, i32
  }
  func.func @transform_5(%arg0: i32, %arg1: i32) -> (i32, i32) {
    %c0_i32 = arith.constant 0 : i32
    %c0_i32_0 = arith.constant 0 : i32
    %c0_i32_1 = arith.constant 0 : i32
    return %c0_i32, %c0_i32_0 : i32, i32
  }
  func.func @transform_6(%arg0: i32, %arg1: i32) -> (i32, i32) {
    %c0_i32 = arith.constant 0 : i32
    %c0_i32_0 = arith.constant 0 : i32
    %c0_i32_1 = arith.constant 0 : i32
    return %c0_i32, %c0_i32_0 : i32, i32
  }
  func.func @transform_7(%arg0: i32, %arg1: i32) -> (i32, i32) {
    %c0_i32 = arith.constant 0 : i32
    %c0_i32_0 = arith.constant 0 : i32
    %c0_i32_1 = arith.constant 0 : i32
    return %c0_i32, %c0_i32_0 : i32, i32
  }
  func.func @transform_8(%arg0: i32, %arg1: i32) -> (i32, i32) {
    %c0_i32 = arith.constant 0 : i32
    %c0_i32_0 = arith.constant 0 : i32
    %c0_i32_1 = arith.constant 0 : i32
    return %c0_i32, %c0_i32_0 : i32, i32
  }
  func.func @transform_9(%arg0: i32, %arg1: i32) -> (i32, i32) {
    %c0_i32 = arith.constant 0 : i32
    %c0_i32_0 = arith.constant 0 : i32
    %c0_i32_1 = arith.constant 0 : i32
    return %c0_i32, %c0_i32_0 : i32, i32
  }
  func.func @transform_10(%arg0: i32, %arg1: i32) -> (i32, i32) {
    %c0_i32 = arith.constant 0 : i32
    %c0_i32_0 = arith.constant 0 : i32
    %c0_i32_1 = arith.constant 0 : i32
    return %c0_i32, %c0_i32_0 : i32, i32
  }
  func.func @transform_11(%arg0: i32, %arg1: i32) -> (i32, i32) {
    %c0_i32 = arith.constant 0 : i32
    %c0_i32_0 = arith.constant 0 : i32
    %c0_i32_1 = arith.constant 0 : i32
    return %c0_i32, %c0_i32_0 : i32, i32
  }
  func.func @transform_12(%arg0: i32, %arg1: i32) -> (i32, i32) {
    %c0_i32 = arith.constant 0 : i32
    %c0_i32_0 = arith.constant 0 : i32
    %c0_i32_1 = arith.constant 0 : i32
    return %c0_i32, %c0_i32_0 : i32, i32
  }
  func.func @transform_13(%arg0: i32, %arg1: i32) -> (i32, i32) {
    %c0_i32 = arith.constant 0 : i32
    %c0_i32_0 = arith.constant 0 : i32
    %c0_i32_1 = arith.constant 0 : i32
    return %c0_i32, %c0_i32_0 : i32, i32
  }
  func.func @transform_14(%arg0: i32, %arg1: i32) -> (i32, i32) {
    %c0_i32 = arith.constant 0 : i32
    %c0_i32_0 = arith.constant 0 : i32
    %c0_i32_1 = arith.constant 0 : i32
    return %c0_i32, %c0_i32_0 : i32, i32
  }
  func.func @transform_15(%arg0: i32, %arg1: i32) -> (i32, i32) {
    %c0_i32 = arith.constant 0 : i32
    %c0_i32_0 = arith.constant 0 : i32
    %c0_i32_1 = arith.constant 0 : i32
    return %c0_i32, %c0_i32_0 : i32, i32
  }
  func.func @transform_16(%arg0: i32, %arg1: i32) -> (i32, i32) {
    %c0_i32 = arith.constant 0 : i32
    %c0_i32_0 = arith.constant 0 : i32
    %c0_i32_1 = arith.constant 0 : i32
    return %c0_i32, %c0_i32_0 : i32, i32
  }
  func.func @transform_17(%arg0: i32, %arg1: i32) -> (i32, i32) {
    %c0_i32 = arith.constant 0 : i32
    %c0_i32_0 = arith.constant 0 : i32
    return %arg0, %c0_i32 : i32, i32
  }
}

</mosaic_0001>

<llo_original>
// kernel: tpu_custom_call.1
$region0: #{tpu_custom_call.1}
  #allocation0 [shape = 'u32[]', space=smem, size = 0x4, offset = 0x4, fixed_abs, tag = 'smem constant byte address 0x4 - core index']
  #allocation1 [shape = 'u32[72,128]{1,0:T(1,128)}', space=vmem, size = 0x9000, scoped, tag = 'internal scratch']
  #allocation2 [shape = 'f32[8,1]{1,0:T(8,128)}', space=vmem, size = 0x1000, scoped, tag = 'scratch operand']
  %s0 = inlined_call_operand.hbm [shape: f32[8,256], index: 0, kind: input, shape index: {}]
  %s1 = inlined_call_operand.hbm [shape: f32[2,8], index: 1, kind: input, shape index: {}]
  %s2 = inlined_call_operand.hbm [shape: f32[2,8], index: 2, kind: input, shape index: {}]
  %s3 = inlined_call_operand.vmem [shape: f32[8,4], index: 3, kind: input, shape index: {}]
  %s4 = inlined_call_operand.vmem [shape: f32[4,32], index: 4, kind: input, shape index: {}]
  %s5 = inlined_call_operand.hbm [shape: f32[1,32], index: 5, kind: input, shape index: {}]
  %s6 = inlined_call_operand.hbm [shape: f32[8,512], index: 6, kind: input, shape index: {}]
  %s7 = inlined_call_operand.vmem [shape: f32[1,512], index: 7, kind: input, shape index: {}]
  %s8 = inlined_call_operand.vmem [shape: f32[1,512], index: 8, kind: input, shape index: {}]
  %s9 = inlined_call_operand.vmem [shape: f32[1,512], index: 9, kind: input, shape index: {}]
  %s10 = inlined_call_operand.hbm [shape: f32[512,256], index: 10, kind: input, shape index: {}]
  %s11 = inlined_call_operand.vmem [shape: f32[1,256], index: 11, kind: input, shape index: {}]
  %s12 = inlined_call_operand.vmem [shape: f32[1,256], index: 12, kind: input, shape index: {}]
  %s13 = inlined_call_operand.vmem [shape: f32[1,256], index: 13, kind: input, shape index: {}]
  %s14 = inlined_call_operand.hbm [shape: f32[32,128], index: 14, kind: input, shape index: {}]
  %s15 = inlined_call_operand.hbm [shape: f32[256,128], index: 15, kind: input, shape index: {}]
  %s16 = inlined_call_operand.vmem [shape: f32[1,128], index: 16, kind: input, shape index: {}]
  %s17 = inlined_call_operand.hbm [shape: f32[2,128], index: 17, kind: output, shape index: {}]
  %s18 = sld [smem:[#allocation0]]
  $region141: #{tpu_custom_call.1} parent=0
    _
  %s20 = ssub.s32 1, %s18
  %s21 = scalar_select 0, %s20, %s18
  $region1: #{tpu_custom_call.1} parent=0
    #allocation3 [shape = 'u8[8192]{0}', space=vmem, size = 0x2000, scoped, tag = 'input window, operand 0']
    #allocation4 [shape = 's32[2]{0}', space=sflag, size = 0x8, scoped, tag = 'scoped memory for tpu_custom_call.1']
    #allocation5 [shape = 's32[2]{0}', space=sflag, size = 0x8, scoped, tag = 'scoped memory for tpu_custom_call.1']
    #allocation6 [shape = 'u8[1024]{0}', space=vmem, size = 0x400, scoped, tag = 'input window, operand 1, single buffered']
    #allocation7 [shape = 's32[1]{0}', space=sflag, size = 0x4, scoped, tag = 'scoped memory for tpu_custom_call.1']
    #allocation8 [shape = 'u8[1024]{0}', space=vmem, size = 0x400, scoped, tag = 'input window, operand 2, single buffered']
    #allocation9 [shape = 'u8[512]{0}', space=vmem, size = 0x400, scoped, tag = 'input window, operand 5, single buffered']
    #allocation10 [shape = 's32[1]{0}', space=sflag, size = 0x4, scoped, tag = 'scoped memory for tpu_custom_call.1']
    #allocation11 [shape = 'u8[16384]{0}', space=vmem, size = 0x4000, scoped, tag = 'input window, operand 6, single buffered']
    #allocation12 [shape = 'u8[524288]{0}', space=vmem, size = 0x80000, scoped, tag = 'input window, operand 10, single buffered']
    #allocation13 [shape = 's32[1]{0}', space=sflag, size = 0x4, scoped, tag = 'scoped memory for tpu_custom_call.1']
    #allocation14 [shape = 'u8[16384]{0}', space=vmem, size = 0x4000, scoped, tag = 'input window, operand 14, single buffered']
    #allocation15 [shape = 'u8[131072]{0}', space=vmem, size = 0x20000, scoped, tag = 'input window, operand 15, single buffered']
    #allocation16 [shape = 's32[1]{0}', space=sflag, size = 0x4, scoped, tag = 'scoped memory for tpu_custom_call.1']
    #allocation17 [shape = 'u8[1024]{0}', space=vmem, size = 0x400, scoped, tag = 'output window, operand 0, single buffered']
    %22 = vsyncpa [#allocation4], 0
    %s23 = scalar_lea.sflag [#allocation4], 1
    %24 = vsyncpa %s23, 0
    %25 = vsyncpa [#allocation7], 0
    %26 = vsyncpa [#allocation10], 0
    %27 = vsyncpa [#allocation13], 0
    %28 = vsyncpa [#allocation16], 0
    %29 = vsyncpa [#allocation5], 0
    loop: start=0, step=1, limit=4
    $region2: #{tpu_custom_call.1} parent=1 // loop_pre_header
      _
    $region3: #{tpu_custom_call.1} parent=1 // loop_header
      %s31 = sphi 0, %s35
      %p32 = scmp.ge.s32.totalorder %s31, 4
      %s38 = sphi 0, %s50
      %s39 = sphi 0, %s46
      %s40 = sphi 0, %s38
      %s41 = sphi 0, %s39
      %s42 = sphi 0, %s40
      %s43 = sphi 0, %s41
      %s55 = sphi 0, %s57
      %s58 = sphi 0, %s55
      %s59 = sphi 0, %s58
      %s75 = sphi 0, %s59
      %s81 = sphi 0, %s83
      %s84 = sphi 0, %s81
      %s85 = sphi 0, %s84
      %s101 = sphi 0, %s85
      %s105 = sphi 0, %s105
      %s107 = sphi 0, %s105
      %s108 = sphi 0, %s107
      %s122 = sphi 0, %s108
      %s126 = sphi 0, %s126
      %s128 = sphi 0, %s126
      %s129 = sphi 0, %s128
      %s143 = sphi 0, %s129
      %s147 = sphi 0, %s147
      %s149 = sphi 0, %s147
      %s150 = sphi 0, %s149
      %s164 = sphi 0, %s150
      %s168 = sphi 0, %s168
      %s170 = sphi 0, %s168
      %s171 = sphi 0, %s170
      %s185 = sphi 0, %s171
      %s189 = sphi 0, %s189
      %s191 = sphi 0, %s189
      %s192 = sphi 0, %s191
      %s206 = sphi 0, %s192
      %s210 = sphi 0, %s210
      %s212 = sphi 0, %s210
      %s213 = sphi 0, %s212
      %s227 = sphi 0, %s213
      %s231 = sphi 0, %s231
      %s233 = sphi 0, %s231
      %s234 = sphi 0, %s233
      %s248 = sphi 0, %s234
      %s252 = sphi 0, %s252
      %s254 = sphi 0, %s252
      %s255 = sphi 0, %s254
      %s269 = sphi 0, %s255
      %s273 = sphi 0, %s273
      %s275 = sphi 0, %s273
      %s276 = sphi 0, %s275
      %s290 = sphi 0, %s276
      %s294 = sphi 0, %s294
      %s296 = sphi 0, %s294
      %s297 = sphi 0, %s296
      %s311 = sphi 0, %s297
      %s315 = sphi 0, %s315
      %s317 = sphi 0, %s315
      %s318 = sphi 0, %s317
      %s332 = sphi 0, %s318
      %s336 = sphi 0, %s336
      %s338 = sphi 0, %s336
      %s339 = sphi 0, %s338
      %s353 = sphi 0, %s339
      %s357 = sphi 0, %s357
      %s359 = sphi 0, %s357
      %s360 = sphi 0, %s359
      %s374 = sphi 0, %s360
      %s378 = sphi 0, %s378
      %s380 = sphi 0, %s378
      %s381 = sphi 0, %s380
      %s395 = sphi 0, %s381
      %s399 = sphi 0, %s399
      %s401 = sphi 0, %s399
      %s402 = sphi 0, %s401
      %s416 = sphi 0, %s402
      %s422 = sphi 0, %s424
      %s425 = sphi 0, %s422
      %s426 = sphi 0, %s425
      %s442 = sphi 0, %s426
    $region4: #{tpu_custom_call.1} parent=1 // loop_header_branch
      %34 = sbr.rel (%p32) target = $region8
    $region5: #{tpu_custom_call.1} parent=1 // loop_body
      %s36 = ssub.s32 %s31, 1
      %s37 = ssub.s32 %s31, 2
      %s44 = sadd.s32 1, %s39
      %p45 = scmp.ge.s32.totalorder %s44, 2
      %s46 = scalar_select %p45, 0, %s44
      %s47 = sadd.s32 1, %s38
      %s48 = scalar_select %p45, %s47, %s38
      %p49 = scmp.ge.s32.totalorder %s48, 1
      %s50 = scalar_select %p49, 0, %s48
      %s51 = ssub.s32 %s38, %s50
      %s52 = ssub.s32 %s39, %s46
      %s53 = sor.u32 %s51, %s52
      %p54 = scmp.eq.s32.totalorder %s53, 0
      %s56 = sadd.s32 %s55, 1
      %s57 = scalar_select %p54, %s55, %s56
      %p60 = pneg %p54
      %p61 = scmp.eq.s32.totalorder %s31, 1
      %p62 = por %p60, %p61
      %p63 = scmp.ne.s32.totalorder %s55, %s58
      %p64 = scmp.eq.s32.totalorder %s31, 0
      %p65 = por %p63, %p64
      %p66 = scmp.ne.s32.totalorder %s55, %s58
      %p67 = scmp.eq.s32.totalorder %s36, 1
      %p68 = por %p66, %p67
      %p69 = scmp.ne.s32.totalorder %s58, %s59
      %p70 = scmp.eq.s32.totalorder %s36, 0
      %p71 = por %p69, %p70
      %p72 = scmp.ne.s32.totalorder %s58, %s59
      %p73 = scmp.eq.s32.totalorder %s37, 1
      %p74 = por %p72, %p73
      %p76 = scmp.ne.s32.totalorder %s59, %s75
      %p77 = scmp.eq.s32.totalorder %s37, 0
      %p78 = por %p76, %p77
      %s79 = ssub.s32 %s38, %s50
      %p80 = scmp.eq.s32.totalorder %s79, 0
      %s82 = sadd.s32 %s81, 1
      %s83 = scalar_select %p80, %s81, %s82
      %p86 = pneg %p80
      %p87 = scmp.eq.s32.totalorder %s31, 1
      %p88 = por %p86, %p87
      %p89 = scmp.ne.s32.totalorder %s81, %s84
      %p90 = scmp.eq.s32.totalorder %s31, 0
      %p91 = por %p89, %p90
      %p92 = scmp.ne.s32.totalorder %s81, %s84
      %p93 = scmp.eq.s32.totalorder %s36, 1
      %p94 = por %p92, %p93
      %p95 = scmp.ne.s32.totalorder %s84, %s85
      %p96 = scmp.eq.s32.totalorder %s36, 0
      %p97 = por %p95, %p96
      %p98 = scmp.ne.s32.totalorder %s84, %s85
      %p99 = scmp.eq.s32.totalorder %s37, 1
      %p100 = por %p98, %p99
      %p102 = scmp.ne.s32.totalorder %s85, %s101
      %p103 = scmp.eq.s32.totalorder %s37, 0
      %p104 = por %p102, %p103
      %s106 = sadd.s32 %s105, 1
      %p109 = scmp.eq.s32.totalorder %s31, 1
      %p110 = scmp.ne.s32.totalorder %s105, %s107
      %p111 = scmp.eq.s32.totalorder %s31, 0
      %p112 = por %p110, %p111
      %p113 = scmp.ne.s32.totalorder %s105, %s107
      %p114 = scmp.eq.s32.totalorder %s36, 1
      %p115 = por %p113, %p114
      %p116 = scmp.ne.s32.totalorder %s107, %s108
      %p117 = scmp.eq.s32.totalorder %s36, 0
      %p118 = por %p116, %p117
      %p119 = scmp.ne.s32.totalorder %s107, %s108
      %p120 = scmp.eq.s32.totalorder %s37, 1
      %p121 = por %p119, %p120
      %p123 = scmp.ne.s32.totalorder %s108, %s122
      %p124 = scmp.eq.s32.totalorder %s37, 0
      %p125 = por %p123, %p124
      %s127 = sadd.s32 %s126, 1
      %p130 = scmp.eq.s32.totalorder %s31, 1
      %p131 = scmp.ne.s32.totalorder %s126, %s128
      %p132 = scmp.eq.s32.totalorder %s31, 0
      %p133 = por %p131, %p132
      %p134 = scmp.ne.s32.totalorder %s126, %s128
      %p135 = scmp.eq.s32.totalorder %s36, 1
      %p136 = por %p134, %p135
      %p137 = scmp.ne.s32.totalorder %s128, %s129
      %p138 = scmp.eq.s32.totalorder %s36, 0
      %p139 = por %p137, %p138
      %p140 = scmp.ne.s32.totalorder %s128, %s129
      %p141 = scmp.eq.s32.totalorder %s37, 1
      %p142 = por %p140, %p141
      %p144 = scmp.ne.s32.totalorder %s129, %s143
      %p145 = scmp.eq.s32.totalorder %s37, 0
      %p146 = por %p144, %p145
      %s148 = sadd.s32 %s147, 1
      %p151 = scmp.eq.s32.totalorder %s31, 1
      %p152 = scmp.ne.s32.totalorder %s147, %s149
      %p153 = scmp.eq.s32.totalorder %s31, 0
      %p154 = por %p152, %p153
      %p155 = scmp.ne.s32.totalorder %s147, %s149
      %p156 = scmp.eq.s32.totalorder %s36, 1
      %p157 = por %p155, %p156
      %p158 = scmp.ne.s32.totalorder %s149, %s150
      %p159 = scmp.eq.s32.totalorder %s36, 0
      %p160 = por %p158, %p159
      %p161 = scmp.ne.s32.totalorder %s149, %s150
      %p162 = scmp.eq.s32.totalorder %s37, 1
      %p163 = por %p161, %p162
      %p165 = scmp.ne.s32.totalorder %s150, %s164
      %p166 = scmp.eq.s32.totalorder %s37, 0
      %p167 = por %p165, %p166
      %s169 = sadd.s32 %s168, 1
      %p172 = scmp.eq.s32.totalorder %s31, 1
      %p173 = scmp.ne.s32.totalorder %s168, %s170
      %p174 = scmp.eq.s32.totalorder %s31, 0
      %p175 = por %p173, %p174
      %p176 = scmp.ne.s32.totalorder %s168, %s170
      %p177 = scmp.eq.s32.totalorder %s36, 1
      %p178 = por %p176, %p177
      %p179 = scmp.ne.s32.totalorder %s170, %s171
      %p180 = scmp.eq.s32.totalorder %s36, 0
      %p181 = por %p179, %p180
      %p182 = scmp.ne.s32.totalorder %s170, %s171
      %p183 = scmp.eq.s32.totalorder %s37, 1
      %p184 = por %p182, %p183
      %p186 = scmp.ne.s32.totalorder %s171, %s185
      %p187 = scmp.eq.s32.totalorder %s37, 0
      %p188 = por %p186, %p187
      %s190 = sadd.s32 %s189, 1
      %p193 = scmp.eq.s32.totalorder %s31, 1
      %p194 = scmp.ne.s32.totalorder %s189, %s191
      %p195 = scmp.eq.s32.totalorder %s31, 0
      %p196 = por %p194, %p195
      %p197 = scmp.ne.s32.totalorder %s189, %s191
      %p198 = scmp.eq.s32.totalorder %s36, 1
      %p199 = por %p197, %p198
      %p200 = scmp.ne.s32.totalorder %s191, %s192
      %p201 = scmp.eq.s32.totalorder %s36, 0
      %p202 = por %p200, %p201
      %p203 = scmp.ne.s32.totalorder %s191, %s192
      %p204 = scmp.eq.s32.totalorder %s37, 1
      %p205 = por %p203, %p204
      %p207 = scmp.ne.s32.totalorder %s192, %s206
      %p208 = scmp.eq.s32.totalorder %s37, 0
      %p209 = por %p207, %p208
      %s211 = sadd.s32 %s210, 1
      %p214 = scmp.eq.s32.totalorder %s31, 1
      %p215 = scmp.ne.s32.totalorder %s210, %s212
      %p216 = scmp.eq.s32.totalorder %s31, 0
      %p217 = por %p215, %p216
      %p218 = scmp.ne.s32.totalorder %s210, %s212
      %p219 = scmp.eq.s32.totalorder %s36, 1
      %p220 = por %p218, %p219
      %p221 = scmp.ne.s32.totalorder %s212, %s213
      %p222 = scmp.eq.s32.totalorder %s36, 0
      %p223 = por %p221, %p222
      %p224 = scmp.ne.s32.totalorder %s212, %s213
      %p225 = scmp.eq.s32.totalorder %s37, 1
      %p226 = por %p224, %p225
      %p228 = scmp.ne.s32.totalorder %s213, %s227
      %p229 = scmp.eq.s32.totalorder %s37, 0
      %p230 = por %p228, %p229
      %s232 = sadd.s32 %s231, 1
      %p235 = scmp.eq.s32.totalorder %s31, 1
      %p236 = scmp.ne.s32.totalorder %s231, %s233
      %p237 = scmp.eq.s32.totalorder %s31, 0
      %p238 = por %p236, %p237
      %p239 = scmp.ne.s32.totalorder %s231, %s233
      %p240 = scmp.eq.s32.totalorder %s36, 1
      %p241 = por %p239, %p240
      %p242 = scmp.ne.s32.totalorder %s233, %s234
      %p243 = scmp.eq.s32.totalorder %s36, 0
      %p244 = por %p242, %p243
      %p245 = scmp.ne.s32.totalorder %s233, %s234
      %p246 = scmp.eq.s32.totalorder %s37, 1
      %p247 = por %p245, %p246
      %p249 = scmp.ne.s32.totalorder %s234, %s248
      %p250 = scmp.eq.s32.totalorder %s37, 0
      %p251 = por %p249, %p250
      %s253 = sadd.s32 %s252, 1
      %p256 = scmp.eq.s32.totalorder %s31, 1
      %p257 = scmp.ne.s32.totalorder %s252, %s254
      %p258 = scmp.eq.s32.totalorder %s31, 0
      %p259 = por %p257, %p258
      %p260 = scmp.ne.s32.totalorder %s252, %s254
      %p261 = scmp.eq.s32.totalorder %s36, 1
      %p262 = por %p260, %p261
      %p263 = scmp.ne.s32.totalorder %s254, %s255
      %p264 = scmp.eq.s32.totalorder %s36, 0
      %p265 = por %p263, %p264
      %p266 = scmp.ne.s32.totalorder %s254, %s255
      %p267 = scmp.eq.s32.totalorder %s37, 1
      %p268 = por %p266, %p267
      %p270 = scmp.ne.s32.totalorder %s255, %s269
      %p271 = scmp.eq.s32.totalorder %s37, 0
      %p272 = por %p270, %p271
      %s274 = sadd.s32 %s273, 1
      %p277 = scmp.eq.s32.totalorder %s31, 1
      %p278 = scmp.ne.s32.totalorder %s273, %s275
      %p279 = scmp.eq.s32.totalorder %s31, 0
      %p280 = por %p278, %p279
      %p281 = scmp.ne.s32.totalorder %s273, %s275
      %p282 = scmp.eq.s32.totalorder %s36, 1
      %p283 = por %p281, %p282
      %p284 = scmp.ne.s32.totalorder %s275, %s276
      %p285 = scmp.eq.s32.totalorder %s36, 0
      %p286 = por %p284, %p285
      %p287 = scmp.ne.s32.totalorder %s275, %s276
      %p288 = scmp.eq.s32.totalorder %s37, 1
      %p289 = por %p287, %p288
      %p291 = scmp.ne.s32.totalorder %s276, %s290
      %p292 = scmp.eq.s32.totalorder %s37, 0
      %p293 = por %p291, %p292
      %s295 = sadd.s32 %s294, 1
      %p298 = scmp.eq.s32.totalorder %s31, 1
      %p299 = scmp.ne.s32.totalorder %s294, %s296
      %p300 = scmp.eq.s32.totalorder %s31, 0
      %p301 = por %p299, %p300
      %p302 = scmp.ne.s32.totalorder %s294, %s296
      %p303 = scmp.eq.s32.totalorder %s36, 1
      %p304 = por %p302, %p303
      %p305 = scmp.ne.s32.totalorder %s296, %s297
      %p306 = scmp.eq.s32.totalorder %s36, 0
      %p307 = por %p305, %p306
      %p308 = scmp.ne.s32.totalorder %s296, %s297
      %p309 = scmp.eq.s32.totalorder %s37, 1
      %p310 = por %p308, %p309
      %p312 = scmp.ne.s32.totalorder %s297, %s311
      %p313 = scmp.eq.s32.totalorder %s37, 0
      %p314 = por %p312, %p313
      %s316 = sadd.s32 %s315, 1
      %p319 = scmp.eq.s32.totalorder %s31, 1
      %p320 = scmp.ne.s32.totalorder %s315, %s317
      %p321 = scmp.eq.s32.totalorder %s31, 0
      %p322 = por %p320, %p321
      %p323 = scmp.ne.s32.totalorder %s315, %s317
      %p324 = scmp.eq.s32.totalorder %s36, 1
      %p325 = por %p323, %p324
      %p326 = scmp.ne.s32.totalorder %s317, %s318
      %p327 = scmp.eq.s32.totalorder %s36, 0
      %p328 = por %p326, %p327
      %p329 = scmp.ne.s32.totalorder %s317, %s318
      %p330 = scmp.eq.s32.totalorder %s37, 1
      %p331 = por %p329, %p330
      %p333 = scmp.ne.s32.totalorder %s318, %s332
      %p334 = scmp.eq.s32.totalorder %s37, 0
      %p335 = por %p333, %p334
      %s337 = sadd.s32 %s336, 1
      %p340 = scmp.eq.s32.totalorder %s31, 1
      %p341 = scmp.ne.s32.totalorder %s336, %s338
      %p342 = scmp.eq.s32.totalorder %s31, 0
      %p343 = por %p341, %p342
      %p344 = scmp.ne.s32.totalorder %s336, %s338
      %p345 = scmp.eq.s32.totalorder %s36, 1
      %p346 = por %p344, %p345
      %p347 = scmp.ne.s32.totalorder %s338, %s339
      %p348 = scmp.eq.s32.totalorder %s36, 0
      %p349 = por %p347, %p348
      %p350 = scmp.ne.s32.totalorder %s338, %s339
      %p351 = scmp.eq.s32.totalorder %s37, 1
      %p352 = por %p350, %p351
      %p354 = scmp.ne.s32.totalorder %s339, %s353
      %p355 = scmp.eq.s32.totalorder %s37, 0
      %p356 = por %p354, %p355
      %s358 = sadd.s32 %s357, 1
      %p361 = scmp.eq.s32.totalorder %s31, 1
      %p362 = scmp.ne.s32.totalorder %s357, %s359
      %p363 = scmp.eq.s32.totalorder %s31, 0
      %p364 = por %p362, %p363
      %p365 = scmp.ne.s32.totalorder %s357, %s359
      %p366 = scmp.eq.s32.totalorder %s36, 1
      %p367 = por %p365, %p366
      %p368 = scmp.ne.s32.totalorder %s359, %s360
      %p369 = scmp.eq.s32.totalorder %s36, 0
      %p370 = por %p368, %p369
      %p371 = scmp.ne.s32.totalorder %s359, %s360
      %p372 = scmp.eq.s32.totalorder %s37, 1
      %p373 = por %p371, %p372
      %p375 = scmp.ne.s32.totalorder %s360, %s374
      %p376 = scmp.eq.s32.totalorder %s37, 0
      %p377 = por %p375, %p376
      %s379 = sadd.s32 %s378, 1
      %p382 = scmp.eq.s32.totalorder %s31, 1
      %p383 = scmp.ne.s32.totalorder %s378, %s380
      %p384 = scmp.eq.s32.totalorder %s31, 0
      %p385 = por %p383, %p384
      %p386 = scmp.ne.s32.totalorder %s378, %s380
      %p387 = scmp.eq.s32.totalorder %s36, 1
      %p388 = por %p386, %p387
      %p389 = scmp.ne.s32.totalorder %s380, %s381
      %p390 = scmp.eq.s32.totalorder %s36, 0
      %p391 = por %p389, %p390
      %p392 = scmp.ne.s32.totalorder %s380, %s381
      %p393 = scmp.eq.s32.totalorder %s37, 1
      %p394 = por %p392, %p393
      %p396 = scmp.ne.s32.totalorder %s381, %s395
      %p397 = scmp.eq.s32.totalorder %s37, 0
      %p398 = por %p396, %p397
      %s400 = sadd.s32 %s399, 1
      %p403 = scmp.eq.s32.totalorder %s31, 1
      %p404 = scmp.ne.s32.totalorder %s399, %s401
      %p405 = scmp.eq.s32.totalorder %s31, 0
      %p406 = por %p404, %p405
      %p407 = scmp.ne.s32.totalorder %s399, %s401
      %p408 = scmp.eq.s32.totalorder %s36, 1
      %p409 = por %p407, %p408
      %p410 = scmp.ne.s32.totalorder %s401, %s402
      %p411 = scmp.eq.s32.totalorder %s36, 0
      %p412 = por %p410, %p411
      %p413 = scmp.ne.s32.totalorder %s401, %s402
      %p414 = scmp.eq.s32.totalorder %s37, 1
      %p415 = por %p413, %p414
      %p417 = scmp.ne.s32.totalorder %s402, %s416
      %p418 = scmp.eq.s32.totalorder %s37, 0
      %p419 = por %p417, %p418
      %s420 = ssub.s32 %s38, %s50
      %p421 = scmp.eq.s32.totalorder %s420, 0
      %s423 = sadd.s32 %s422, 1
      %s424 = scalar_select %p421, %s422, %s423
      %p427 = pneg %p421
      %p428 = scmp.eq.s32.totalorder %s31, 1
      %p429 = por %p427, %p428
      %p430 = scmp.ne.s32.totalorder %s422, %s425
      %p431 = scmp.eq.s32.totalorder %s31, 0
      %p432 = por %p430, %p431
      %p433 = scmp.ne.s32.totalorder %s422, %s425
      %p434 = scmp.eq.s32.totalorder %s36, 1
      %p435 = por %p433, %p434
      %p436 = scmp.ne.s32.totalorder %s425, %s426
      %p437 = scmp.eq.s32.totalorder %s36, 0
      %p438 = por %p436, %p437
      %p439 = scmp.ne.s32.totalorder %s425, %s426
      %p440 = scmp.eq.s32.totalorder %s37, 1
      %p441 = por %p439, %p440
      %p443 = scmp.ne.s32.totalorder %s426, %s442
      %p444 = scmp.eq.s32.totalorder %s37, 0
      %p445 = por %p443, %p444
      %p446 = scmp.le.s32.totalorder 1, %s31
      %p447 = scmp.lt.s32.totalorder %s31, 3
      %p448 = pnand %p446, %p447
      %p449 = pneg %p448
      // Predicated region
      $region9: #{tpu_custom_call.1} parent=5 // pred_check
        _
      $region10: #{tpu_custom_call.1} parent=5 // pred_check_branch
        %451 = sbr.rel (%p448) target = $region12
      $region11: #{tpu_custom_call.1} parent=5 // pred_region
        %s452 = ssub.s32 %s31, 1
        // Predicated region
        $region13: #{tpu_custom_call.1} parent=11 // pred_check
          %p453 = pneg %p97
        $region14: #{tpu_custom_call.1} parent=11 // pred_check_branch
          %455 = sbr.rel (%p453) target = $region16
        $region15: #{tpu_custom_call.1} parent=11 // pred_region
          %457 = vsyncadd [#allocation7], 0
          %s458 = smul.addr %s40, 2
          %s459 = scalar_lea.hbm %s1, %s458
          %s461 = sshll.u32 %s459, 4
          %s462 = int_to_ptr.hbm [resolvable:$true] %s461
          %s463 = sshll.u32 [#allocation6], 4
          %s464 = int_to_ptr.vmem [resolvable:$true] %s463
          %466 = dma.hbm_to_vmem [thread:$0]  %s462, 32, %s464, [#allocation7]
        $region16: #{tpu_custom_call.1} parent=11 // pred_fallthru
          _
        // Predicated region
        $region17: #{tpu_custom_call.1} parent=11 // pred_check
          %p467 = pneg %p118
        $region18: #{tpu_custom_call.1} parent=11 // pred_check_branch
          %469 = sbr.rel (%p467) target = $region20
        $region19: #{tpu_custom_call.1} parent=11 // pred_region
          %471 = vsyncadd [#allocation7], 0
          %s473 = sshll.u32 %s2, 4
          %s474 = int_to_ptr.hbm [resolvable:$true] %s473
          %s475 = sshll.u32 [#allocation8], 4
          %s476 = int_to_ptr.vmem [resolvable:$true] %s475
          %478 = dma.hbm_to_vmem [thread:$0]  %s474, 32, %s476, [#allocation7]
        $region20: #{tpu_custom_call.1} parent=11 // pred_fallthru
          _
        // Predicated region
        $region21: #{tpu_custom_call.1} parent=11 // pred_check
          %p479 = pneg %p139
        $region22: #{tpu_custom_call.1} parent=11 // pred_check_branch
          %481 = sbr.rel (%p479) target = $region24
        $region23: #{tpu_custom_call.1} parent=11 // pred_region
          _
        $region24: #{tpu_custom_call.1} parent=11 // pred_fallthru
          _
        // Predicated region
        $region25: #{tpu_custom_call.1} parent=11 // pred_check
          %p482 = pneg %p160
        $region26: #{tpu_custom_call.1} parent=11 // pred_check_branch
          %484 = sbr.rel (%p482) target = $region28
        $region27: #{tpu_custom_call.1} parent=11 // pred_region
          _
        $region28: #{tpu_custom_call.1} parent=11 // pred_fallthru
          _
        // Predicated region
        $region29: #{tpu_custom_call.1} parent=11 // pred_check
          %p485 = pneg %p181
        $region30: #{tpu_custom_call.1} parent=11 // pred_check_branch
          %487 = sbr.rel (%p485) target = $region32
        $region31: #{tpu_custom_call.1} parent=11 // pred_region
          %489 = vsyncadd [#allocation10], 0
          %s491 = sshll.u32 %s5, 4
          %s492 = int_to_ptr.hbm [resolvable:$true] %s491
          %s493 = sshll.u32 [#allocation9], 4
          %s494 = int_to_ptr.vmem [resolvable:$true] %s493
          %496 = dma.hbm_to_vmem [thread:$0]  %s492, 16, %s494, [#allocation10]
        $region32: #{tpu_custom_call.1} parent=11 // pred_fallthru
          _
        // Predicated region
        $region33: #{tpu_custom_call.1} parent=11 // pred_check
          %p497 = pneg %p202
        $region34: #{tpu_custom_call.1} parent=11 // pred_check_branch
          %499 = sbr.rel (%p497) target = $region36
        $region35: #{tpu_custom_call.1} parent=11 // pred_region
          %501 = vsyncadd [#allocation10], 0
          %s503 = sshll.u32 %s6, 4
          %s504 = int_to_ptr.hbm [resolvable:$true] %s503
          %s505 = sshll.u32 [#allocation11], 4
          %s506 = int_to_ptr.vmem [resolvable:$true] %s505
          %508 = dma.hbm_to_vmem [thread:$0]  %s504, 512, %s506, [#allocation10]
        $region36: #{tpu_custom_call.1} parent=11 // pred_fallthru
          _
        // Predicated region
        $region37: #{tpu_custom_call.1} parent=11 // pred_check
          %p509 = pneg %p223
        $region38: #{tpu_custom_call.1} parent=11 // pred_check_branch
          %511 = sbr.rel (%p509) target = $region40
        $region39: #{tpu_custom_call.1} parent=11 // pred_region
          _
        $region40: #{tpu_custom_call.1} parent=11 // pred_fallthru
          _
        // Predicated region
        $region41: #{tpu_custom_call.1} parent=11 // pred_check
          %p512 = pneg %p244
        $region42: #{tpu_custom_call.1} parent=11 // pred_check_branch
          %514 = sbr.rel (%p512) target = $region44
        $region43: #{tpu_custom_call.1} parent=11 // pred_region
          _
        $region44: #{tpu_custom_call.1} parent=11 // pred_fallthru
          _
        // Predicated region
        $region45: #{tpu_custom_call.1} parent=11 // pred_check
          %p515 = pneg %p265
        $region46: #{tpu_custom_call.1} parent=11 // pred_check_branch
          %517 = sbr.rel (%p515) target = $region48
        $region47: #{tpu_custom_call.1} parent=11 // pred_region
          _
        $region48: #{tpu_custom_call.1} parent=11 // pred_fallthru
          _
        // Predicated region
        $region49: #{tpu_custom_call.1} parent=11 // pred_check
          %p518 = pneg %p286
        $region50: #{tpu_custom_call.1} parent=11 // pred_check_branch
          %520 = sbr.rel (%p518) target = $region52
        $region51: #{tpu_custom_call.1} parent=11 // pred_region
          %522 = vsyncadd [#allocation13], 0
          %s523 = sshll.u32 %s10, 4
          %s524 = int_to_ptr.hbm [resolvable:$true] %s523
          %s525 = sshll.u32 [#allocation12], 4
          %s526 = int_to_ptr.vmem [resolvable:$true] %s525
          %531 = dma.hbm_to_vmem [thread:$0]  %s524, 16384, %s526, [#allocation13], 256, 256, 16
        $region52: #{tpu_custom_call.1} parent=11 // pred_fallthru
          _
        // Predicated region
        $region53: #{tpu_custom_call.1} parent=11 // pred_check
          %p532 = pneg %p307
        $region54: #{tpu_custom_call.1} parent=11 // pred_check_branch
          %534 = sbr.rel (%p532) target = $region56
        $region55: #{tpu_custom_call.1} parent=11 // pred_region
          _
        $region56: #{tpu_custom_call.1} parent=11 // pred_fallthru
          _
        // Predicated region
        $region57: #{tpu_custom_call.1} parent=11 // pred_check
          %p535 = pneg %p328
        $region58: #{tpu_custom_call.1} parent=11 // pred_check_branch
          %537 = sbr.rel (%p535) target = $region60
        $region59: #{tpu_custom_call.1} parent=11 // pred_region
          _
        $region60: #{tpu_custom_call.1} parent=11 // pred_fallthru
          _
        // Predicated region
        $region61: #{tpu_custom_call.1} parent=11 // pred_check
          %p538 = pneg %p349
        $region62: #{tpu_custom_call.1} parent=11 // pred_check_branch
          %540 = sbr.rel (%p538) target = $region64
        $region63: #{tpu_custom_call.1} parent=11 // pred_region
          _
        $region64: #{tpu_custom_call.1} parent=11 // pred_fallthru
          _
        // Predicated region
        $region65: #{tpu_custom_call.1} parent=11 // pred_check
          %p541 = pneg %p370
        $region66: #{tpu_custom_call.1} parent=11 // pred_check_branch
          %543 = sbr.rel (%p541) target = $region68
        $region67: #{tpu_custom_call.1} parent=11 // pred_region
          %545 = vsyncadd [#allocation13], 0
          %s546 = sshll.u32 %s14, 4
          %s547 = int_to_ptr.hbm [resolvable:$true] %s546
          %s548 = sshll.u32 [#allocation14], 4
          %s549 = int_to_ptr.vmem [resolvable:$true] %s548
          %554 = dma.hbm_to_vmem [thread:$0]  %s547, 512, %s549, [#allocation13], 128, 128, 8
        $region68: #{tpu_custom_call.1} parent=11 // pred_fallthru
          _
        // Predicated region
        $region69: #{tpu_custom_call.1} parent=11 // pred_check
          %p555 = pneg %p391
        $region70: #{tpu_custom_call.1} parent=11 // pred_check_branch
          %557 = sbr.rel (%p555) target = $region72
        $region71: #{tpu_custom_call.1} parent=11 // pred_region
          %559 = vsyncadd [#allocation16], 0
          %s560 = sshll.u32 %s15, 4
          %s561 = int_to_ptr.hbm [resolvable:$true] %s560
          %s562 = sshll.u32 [#allocation15], 4
          %s563 = int_to_ptr.vmem [resolvable:$true] %s562
          %568 = dma.hbm_to_vmem [thread:$0]  %s561, 4096, %s563, [#allocation16], 128, 128, 8
        $region72: #{tpu_custom_call.1} parent=11 // pred_fallthru
          _
        // Predicated region
        $region73: #{tpu_custom_call.1} parent=11 // pred_check
          %p569 = pneg %p412
        $region74: #{tpu_custom_call.1} parent=11 // pred_check_branch
          %571 = sbr.rel (%p569) target = $region76
        $region75: #{tpu_custom_call.1} parent=11 // pred_region
          _
        $region76: #{tpu_custom_call.1} parent=11 // pred_fallthru
          _
      $region12: #{tpu_custom_call.1} parent=5 // pred_fallthru
        _
      %p572 = scmp.lt.s32.totalorder %s31, 2
      // Predicated region
      $region77: #{tpu_custom_call.1} parent=5 // pred_check
        %p573 = pneg %p572
      $region78: #{tpu_custom_call.1} parent=5 // pred_check_branch
        %575 = sbr.rel (%p573) target = $region80
      $region79: #{tpu_custom_call.1} parent=5 // pred_region
        // Predicated region
        $region81: #{tpu_custom_call.1} parent=79 // pred_check
          %p576 = pneg %p65
        $region82: #{tpu_custom_call.1} parent=79 // pred_check_branch
          %578 = sbr.rel (%p576) target = $region84
        $region83: #{tpu_custom_call.1} parent=79 // pred_region
          %s579 = sand.u32 %s55, 1
          %s580 = scalar_lea.sflag [#allocation4], %s579
          %s581 = sand.u32 %s55, 1
          %s582 = smul.addr %s581, 8
          %s583 = scalar_lea.vmem [#allocation3], %s582
          %585 = vsyncadd %s580, 0
          %s586 = smul.addr %s38, 2
          %s587 = sadd.s32 %s39, %s586
          %s588 = smul.addr %s587, 8
          %s589 = scalar_lea.hbm %s0, %s588
          %s591 = sshll.u32 %s589, 4
          %s592 = int_to_ptr.hbm [resolvable:$true] %s591
          %s593 = sshll.u32 %s583, 4
          %s594 = int_to_ptr.vmem [resolvable:$true] %s593
          %596 = dma.hbm_to_vmem [thread:$0]  %s592, 128, %s594, %s580
        $region84: #{tpu_custom_call.1} parent=79 // pred_fallthru
          _
      $region80: #{tpu_custom_call.1} parent=5 // pred_fallthru
        _
      %p597 = scmp.le.s32.totalorder 1, %s31
      %p598 = scmp.lt.s32.totalorder %s31, 3
      %p599 = pnand %p597, %p598
      %p600 = pneg %p599
      // Predicated region
      $region85: #{tpu_custom_call.1} parent=5 // pred_check
        _
      $region86: #{tpu_custom_call.1} parent=5 // pred_check_branch
        %602 = sbr.rel (%p599) target = $region88
      $region87: #{tpu_custom_call.1} parent=5 // pred_region
        %s603 = ssub.s32 %s31, 1
        %s604 = sand.u32 %s58, 1
        %s605 = scalar_lea.sflag [#allocation4], %s604
        %s606 = sand.u32 %s58, 1
        %s607 = smul.addr %s606, 8
        %s608 = scalar_lea.vmem [#allocation3], %s607
        // Predicated region
        $region89: #{tpu_custom_call.1} parent=87 // pred_check
          %p609 = pneg %p71
        $region90: #{tpu_custom_call.1} parent=87 // pred_check_branch
          %611 = sbr.rel (%p609) target = $region92
        $region91: #{tpu_custom_call.1} parent=87 // pred_region
          %613 = dma.done %s605, 128
        $region92: #{tpu_custom_call.1} parent=87 // pred_fallthru
          _
        // Predicated region
        $region93: #{tpu_custom_call.1} parent=87 // pred_check
          %p614 = pneg %p97
        $region94: #{tpu_custom_call.1} parent=87 // pred_check_branch
          %616 = sbr.rel (%p614) target = $region96
        $region95: #{tpu_custom_call.1} parent=87 // pred_region
          %618 = dma.done [#allocation7], 32
        $region96: #{tpu_custom_call.1} parent=87 // pred_fallthru
          _
        // Predicated region
        $region97: #{tpu_custom_call.1} parent=87 // pred_check
          %p619 = pneg %p118
        $region98: #{tpu_custom_call.1} parent=87 // pred_check_branch
          %621 = sbr.rel (%p619) target = $region100
        $region99: #{tpu_custom_call.1} parent=87 // pred_region
          %623 = dma.done [#allocation7], 32
        $region100: #{tpu_custom_call.1} parent=87 // pred_fallthru
          _
        // Predicated region
        $region101: #{tpu_custom_call.1} parent=87 // pred_check
          %p624 = pneg %p181
        $region102: #{tpu_custom_call.1} parent=87 // pred_check_branch
          %626 = sbr.rel (%p624) target = $region104
        $region103: #{tpu_custom_call.1} parent=87 // pred_region
          %628 = dma.done [#allocation10], 16
        $region104: #{tpu_custom_call.1} parent=87 // pred_fallthru
          _
        // Predicated region
        $region105: #{tpu_custom_call.1} parent=87 // pred_check
          %p629 = pneg %p202
        $region106: #{tpu_custom_call.1} parent=87 // pred_check_branch
          %631 = sbr.rel (%p629) target = $region108
        $region107: #{tpu_custom_call.1} parent=87 // pred_region
          %633 = dma.done [#allocation10], 512
        $region108: #{tpu_custom_call.1} parent=87 // pred_fallthru
          _
        // Predicated region
        $region109: #{tpu_custom_call.1} parent=87 // pred_check
          %p634 = pneg %p286
        $region110: #{tpu_custom_call.1} parent=87 // pred_check_branch
          %636 = sbr.rel (%p634) target = $region112
        $region111: #{tpu_custom_call.1} parent=87 // pred_region
          %638 = dma.done [#allocation13], 16384
        $region112: #{tpu_custom_call.1} parent=87 // pred_fallthru
          _
        // Predicated region
        $region113: #{tpu_custom_call.1} parent=87 // pred_check
          %p639 = pneg %p370
        $region114: #{tpu_custom_call.1} parent=87 // pred_check_branch
          %641 = sbr.rel (%p639) target = $region116
        $region115: #{tpu_custom_call.1} parent=87 // pred_region
          %643 = dma.done [#allocation13], 512
        $region116: #{tpu_custom_call.1} parent=87 // pred_fallthru
          _
        // Predicated region
        $region117: #{tpu_custom_call.1} parent=87 // pred_check
          %p644 = pneg %p391
        $region118: #{tpu_custom_call.1} parent=87 // pred_check_branch
          %646 = sbr.rel (%p644) target = $region120
        $region119: #{tpu_custom_call.1} parent=87 // pred_region
          %648 = dma.done [#allocation16], 4096
        $region120: #{tpu_custom_call.1} parent=87 // pred_fallthru
          _
        %s649 = sand.u32 %s58, 1
        %s650 = scalar_lea.sflag [#allocation4], %s649
        %s651 = sand.u32 %s58, 1
        %s652 = smul.addr %s651, 8
        %s653 = scalar_lea.vmem [#allocation3], %s652
        %p654 = pneg %p71
        %p655 = pneg %p68
        %p656 = pneg %p97
        %p657 = pneg %p94
        %p658 = pneg %p118
        %p659 = pneg %p115
        %p660 = pneg %p139
        %p661 = pneg %p136
        %p662 = pneg %p160
        %p663 = pneg %p157
        %p664 = pneg %p181
        %p665 = pneg %p178
        %p666 = pneg %p202
        %p667 = pneg %p199
        %p668 = pneg %p223
        %p669 = pneg %p220
        %p670 = pneg %p244
        %p671 = pneg %p241
        %p672 = pneg %p265
        %p673 = pneg %p262
        %p674 = pneg %p286
        %p675 = pneg %p283
        %p676 = pneg %p307
        %p677 = pneg %p304
        %p678 = pneg %p328
        %p679 = pneg %p325
        %p680 = pneg %p349
        %p681 = pneg %p346
        %p682 = pneg %p370
        %p683 = pneg %p367
        %p684 = pneg %p391
        %p685 = pneg %p388
        %p686 = pneg %p412
        %p687 = pneg %p409
        %p688 = pneg %p438
        %p689 = pneg %p435
        %p690 = scmp.eq.s32.totalorder %s41, 0
        // Predicated region
        $region121: #{tpu_custom_call.1} parent=87 // pred_check
          %p691 = pneg %p690
        $region122: #{tpu_custom_call.1} parent=87 // pred_check_branch
          %693 = sbr.rel (%p691) target = $region124
        $region123: #{tpu_custom_call.1} parent=87 // pred_region
          %vm694 = vcmask 7168
          %695 = vst.msk [vmem:[#allocation2] sm:$0xff] %vm694, 0.0
        $region124: #{tpu_custom_call.1} parent=87 // pred_fallthru
          _
        %v696 = vld [vmem:[%s608] sm:$0xff]
        %v697 = vld [vmem:[#allocation2] sm:$0xff]
        %698 = vadd.xlane.f32.xlu0 %v696
        %v699 = vpop.xlane.xlu0 %698
        %v700 = vadd.f32 %v697, %v699
        %vm701 = vcmask 7168
        %702 = vst.msk [vmem:[#allocation2] sm:$0xff] %vm701, %v700
        %p703 = scmp.eq.s32.totalorder %s41, 1
        // Predicated region
        $region125: #{tpu_custom_call.1} parent=87 // pred_check
          %p704 = pneg %p703
        $region126: #{tpu_custom_call.1} parent=87 // pred_check_branch
          %706 = sbr.rel (%p704) target = $region128
        $region127: #{tpu_custom_call.1} parent=87 // pred_region
          %v707 = vld [vmem:[#allocation8] sm:$0x3]
          %v708 = vld [vmem:[#allocation2] sm:$0xff]
          %v709 = vld [vmem:[%s3] sm:$0xff]
          %711 = vset.pattern.permute.xlu0 0
          %712 = vperm.xlu0 %711, %v708
          %v713 = vpop.permute.xlu0 %712
          %v715 = vmul.f32 %v713, %v709
          %vm716 = vcmask 64512
          %v718 = vsel %vm716, %v707, 0
          %720 = vmatpush.msra.mxu0 0.0
          %721 = vmatpush.msra.mxu0 0.0
          %722 = vmatpush.msra.mxu0 0.0
          %723 = vmatpush.msra.mxu0 0.0
          %724 = vmatpush.msra.mxu0 0.0
          %725 = vmatpush.msra.mxu0 0.0
          %726 = vmatpush.msra.mxu0 0.0
          %727 = vmatpush.msra.mxu0 0.0
          %728 = vmatpush.msra.mxu0 0.0
          %729 = vmatpush.msra.mxu0 0.0
          %730 = vmatpush.msra.mxu0 0.0
          %731 = vmatpush.msra.mxu0 0.0
          %732 = vmatpush.msra.mxu0 0.0
          %733 = vmatpush.msra.mxu0 0.0
          %734 = vmatpush.msra.mxu0 0.0
          %735 = vmatpush.msra.mxu0 %v715
          %736 = vmatmul.f32.gmra.mxu0 %v718
          %v737 = vpop.f32.mrf.mxu0
          %v738 = vadd.f32 0.0, %v737
          %739 = vdwg.mxu0
          %v740 = vld [vmem:[%s4] sm:$0xf]
          %v741 = vld [vmem:[#allocation9] sm:$0x1]
          %v743 = vperm.slane %v741, 0
          %vm745 = vcmask 31744
          %v747 = vsel %vm745, %v738, 0
          %vm749 = vcmask 1043456
          %v751 = vsel %vm749, %v740, 0
          %753 = vmatpush.msra.mxu0 0.0
          %754 = vmatpush.msra.mxu0 0.0
          %755 = vmatpush.msra.mxu0 0.0
          %756 = vmatpush.msra.mxu0 0.0
          %757 = vmatpush.msra.mxu0 0.0
          %758 = vmatpush.msra.mxu0 0.0
          %759 = vmatpush.msra.mxu0 0.0
          %760 = vmatpush.msra.mxu0 0.0
          %761 = vmatpush.msra.mxu0 0.0
          %762 = vmatpush.msra.mxu0 0.0
          %763 = vmatpush.msra.mxu0 0.0
          %764 = vmatpush.msra.mxu0 0.0
          %765 = vmatpush.msra.mxu0 0.0
          %766 = vmatpush.msra.mxu0 0.0
          %767 = vmatpush.msra.mxu0 0.0
          %768 = vmatpush.msra.mxu0 %v751
          %769 = vmatmul.f32.gmra.mxu0 %v747
          %v770 = vpop.f32.mrf.mxu0
          %v771 = vadd.f32 %v743, %v770
          %772 = vdwg.mxu0
          %v773 = vld [vmem:[#allocation6] sm:$0x3]
          %v774 = vld [vmem:[#allocation11] sm:$0xff]
          %v775 = vld [vmem:[#allocation11 + $0x8] sm:$0xff]
          %v776 = vld [vmem:[#allocation11 + $0x10] sm:$0xff]
          %v777 = vld [vmem:[#allocation11 + $0x18] sm:$0xff]
          %v778 = vld [vmem:[%s7] sm:$0xf]
          %v780 = vperm.slane %v778, 0
          %v781 = vperm.slane %v778, 1
          %v782 = vperm.slane %v778, 2
          %v783 = vperm.slane %v778, 3
          %v789 = vsel %vm716, %v773, 0
          %791 = vmatpush.msra.mxu0 0.0
          %792 = vmatpush.msra.mxu0 0.0
          %793 = vmatpush.msra.mxu0 0.0
          %794 = vmatpush.msra.mxu0 0.0
          %795 = vmatpush.msra.mxu0 0.0
          %796 = vmatpush.msra.mxu0 0.0
          %797 = vmatpush.msra.mxu0 0.0
          %798 = vmatpush.msra.mxu0 0.0
          %799 = vmatpush.msra.mxu0 0.0
          %800 = vmatpush.msra.mxu0 0.0
          %801 = vmatpush.msra.mxu0 0.0
          %802 = vmatpush.msra.mxu0 0.0
          %803 = vmatpush.msra.mxu0 0.0
          %804 = vmatpush.msra.mxu0 0.0
          %805 = vmatpush.msra.mxu0 0.0
          %806 = vmatpush.msra.mxu0 %v774
          %807 = vmatmul.f32.gmra.mxu0 %v789
          %v808 = vpop.f32.mrf.mxu0
          %v809 = vadd.f32 %v780, %v808
          %810 = vdwg.mxu0
          %811 = vmatpush.msra.mxu0 0.0
          %812 = vmatpush.msra.mxu0 0.0
          %813 = vmatpush.msra.mxu0 0.0
          %814 = vmatpush.msra.mxu0 0.0
          %815 = vmatpush.msra.mxu0 0.0
          %816 = vmatpush.msra.mxu0 0.0
          %817 = vmatpush.msra.mxu0 0.0
          %818 = vmatpush.msra.mxu0 0.0
          %819 = vmatpush.msra.mxu0 0.0
          %820 = vmatpush.msra.mxu0 0.0
          %821 = vmatpush.msra.mxu0 0.0
          %822 = vmatpush.msra.mxu0 0.0
          %823 = vmatpush.msra.mxu0 0.0
          %824 = vmatpush.msra.mxu0 0.0
          %825 = vmatpush.msra.mxu0 0.0
          %826 = vmatpush.msra.mxu0 %v775
          %827 = vmatmul.f32.gmra.mxu0 %v789
          %v828 = vpop.f32.mrf.mxu0
          %v829 = vadd.f32 %v781, %v828
          %830 = vdwg.mxu0
          %831 = vmatpush.msra.mxu0 0.0
          %832 = vmatpush.msra.mxu0 0.0
          %833 = vmatpush.msra.mxu0 0.0
          %834 = vmatpush.msra.mxu0 0.0
          %835 = vmatpush.msra.mxu0 0.0
          %836 = vmatpush.msra.mxu0 0.0
          %837 = vmatpush.msra.mxu0 0.0
          %838 = vmatpush.msra.mxu0 0.0
          %839 = vmatpush.msra.mxu0 0.0
          %840 = vmatpush.msra.mxu0 0.0
          %841 = vmatpush.msra.mxu0 0.0
          %842 = vmatpush.msra.mxu0 0.0
          %843 = vmatpush.msra.mxu0 0.0
          %844 = vmatpush.msra.mxu0 0.0
          %845 = vmatpush.msra.mxu0 0.0
          %846 = vmatpush.msra.mxu0 %v776
          %847 = vmatmul.f32.gmra.mxu0 %v789
          %v848 = vpop.f32.mrf.mxu0
          %v849 = vadd.f32 %v782, %v848
          %850 = vdwg.mxu0
          %851 = vmatpush.msra.mxu0 0.0
          %852 = vmatpush.msra.mxu0 0.0
          %853 = vmatpush.msra.mxu0 0.0
          %854 = vmatpush.msra.mxu0 0.0
          %855 = vmatpush.msra.mxu0 0.0
          %856 = vmatpush.msra.mxu0 0.0
          %857 = vmatpush.msra.mxu0 0.0
          %858 = vmatpush.msra.mxu0 0.0
          %859 = vmatpush.msra.mxu0 0.0
          %860 = vmatpush.msra.mxu0 0.0
          %861 = vmatpush.msra.mxu0 0.0
          %862 = vmatpush.msra.mxu0 0.0
          %863 = vmatpush.msra.mxu0 0.0
          %864 = vmatpush.msra.mxu0 0.0
          %865 = vmatpush.msra.mxu0 0.0
          %866 = vmatpush.msra.mxu0 %v777
          %867 = vmatmul.f32.gmra.mxu0 %v789
          %v868 = vpop.f32.mrf.mxu0
          %v869 = vadd.f32 %v783, %v868
          %870 = vdwg.mxu0
          %v871 = vld [vmem:[%s8] sm:$0xf]
          %v873 = vperm.slane %v871, 0
          %v874 = vperm.slane %v871, 1
          %v875 = vperm.slane %v871, 2
          %v876 = vperm.slane %v871, 3
          %v881 = vmul.f32 %v809, %v873
          %v882 = vmul.f32 %v829, %v874
          %v883 = vmul.f32 %v849, %v875
          %v884 = vmul.f32 %v869, %v876
          %v885 = vld [vmem:[%s9] sm:$0xf]
          %v887 = vperm.slane %v885, 0
          %v888 = vperm.slane %v885, 1
          %v889 = vperm.slane %v885, 2
          %v890 = vperm.slane %v885, 3
          %v895 = vadd.f32 %v881, %v887
          %v896 = vadd.f32 %v882, %v888
          %v897 = vadd.f32 %v883, %v889
          %v898 = vadd.f32 %v884, %v890
          %v899 = vmax.f32 %v895, 0.0
          %v900 = vmax.f32 %v896, 0.0
          %v901 = vmax.f32 %v897, 0.0
          %v902 = vmax.f32 %v898, 0.0
          %v903 = vld [vmem:[#allocation12] sm:$0xff]
          %v904 = vld [vmem:[#allocation12 + $0x8] sm:$0xff]
          %v905 = vld [vmem:[#allocation12 + $0x10] sm:$0xff]
          %v906 = vld [vmem:[#allocation12 + $0x18] sm:$0xff]
          %v907 = vld [vmem:[#allocation12 + $0x20] sm:$0xff]
          %v908 = vld [vmem:[#allocation12 + $0x28] sm:$0xff]
          %v909 = vld [vmem:[#allocation12 + $0x30] sm:$0xff]
          %v910 = vld [vmem:[#allocation12 + $0x38] sm:$0xff]
          %v911 = vld [vmem:[#allocation12 + $0x40] sm:$0xff]
          %v912 = vld [vmem:[#allocation12 + $0x48] sm:$0xff]
          %v913 = vld [vmem:[#allocation12 + $0x50] sm:$0xff]
          %v914 = vld [vmem:[#allocation12 + $0x58] sm:$0xff]
          %v915 = vld [vmem:[#allocation12 + $0x60] sm:$0xff]
          %v916 = vld [vmem:[#allocation12 + $0x68] sm:$0xff]
          %v917 = vld [vmem:[#allocation12 + $0x70] sm:$0xff]
          %v918 = vld [vmem:[#allocation12 + $0x78] sm:$0xff]
          %v919 = vld [vmem:[#allocation12 + $0x80] sm:$0xff]
          %v920 = vld [vmem:[#allocation12 + $0x88] sm:$0xff]
          %v921 = vld [vmem:[#allocation12 + $0x90] sm:$0xff]
          %v922 = vld [vmem:[#allocation12 + $0x98] sm:$0xff]
          %v923 = vld [vmem:[#allocation12 + $0xa0] sm:$0xff]
          %v924 = vld [vmem:[#allocation12 + $0xa8] sm:$0xff]
          %v925 = vld [vmem:[#allocation12 + $0xb0] sm:$0xff]
          %v926 = vld [vmem:[#allocation12 + $0xb8] sm:$0xff]
          %v927 = vld [vmem:[#allocation12 + $0xc0] sm:$0xff]
          %v928 = vld [vmem:[#allocation12 + $0xc8] sm:$0xff]
          %v929 = vld [vmem:[#allocation12 + $0xd0] sm:$0xff]
          %v930 = vld [vmem:[#allocation12 + $0xd8] sm:$0xff]
          %v931 = vld [vmem:[#allocation12 + $0xe0] sm:$0xff]
          %v932 = vld [vmem:[#allocation12 + $0xe8] sm:$0xff]
          %v933 = vld [vmem:[#allocation12 + $0xf0] sm:$0xff]
          %v934 = vld [vmem:[#allocation12 + $0xf8] sm:$0xff]
          %v935 = vld [vmem:[#allocation12 + $0x100] sm:$0xff]
          %v936 = vld [vmem:[#allocation12 + $0x108] sm:$0xff]
          %v937 = vld [vmem:[#allocation12 + $0x110] sm:$0xff]
          %v938 = vld [vmem:[#allocation12 + $0x118] sm:$0xff]
          %v939 = vld [vmem:[#allocation12 + $0x120] sm:$0xff]
          %v940 = vld [vmem:[#allocation12 + $0x128] sm:$0xff]
          %v941 = vld [vmem:[#allocation12 + $0x130] sm:$0xff]
          %v942 = vld [vmem:[#allocation12 + $0x138] sm:$0xff]
          %v943 = vld [vmem:[#allocation12 + $0x140] sm:$0xff]
          %v944 = vld [vmem:[#allocation12 + $0x148] sm:$0xff]
          %v945 = vld [vmem:[#allocation12 + $0x150] sm:$0xff]
          %v946 = vld [vmem:[#allocation12 + $0x158] sm:$0xff]
          %v947 = vld [vmem:[#allocation12 + $0x160] sm:$0xff]
          %v948 = vld [vmem:[#allocation12 + $0x168] sm:$0xff]
          %v949 = vld [vmem:[#allocation12 + $0x170] sm:$0xff]
          %v950 = vld [vmem:[#allocation12 + $0x178] sm:$0xff]
          %v951 = vld [vmem:[#allocation12 + $0x180] sm:$0xff]
          %v952 = vld [vmem:[#allocation12 + $0x188] sm:$0xff]
          %v953 = vld [vmem:[#allocation12 + $0x190] sm:$0xff]
          %v954 = vld [vmem:[#allocation12 + $0x198] sm:$0xff]
          %v955 = vld [vmem:[#allocation12 + $0x1a0] sm:$0xff]
          %v956 = vld [vmem:[#allocation12 + $0x1a8] sm:$0xff]
          %v957 = vld [vmem:[#allocation12 + $0x1b0] sm:$0xff]
          %v958 = vld [vmem:[#allocation12 + $0x1b8] sm:$0xff]
          %v959 = vld [vmem:[#allocation12 + $0x1c0] sm:$0xff]
          %v960 = vld [vmem:[#allocation12 + $0x1c8] sm:$0xff]
          %v961 = vld [vmem:[#allocation12 + $0x1d0] sm:$0xff]
          %v962 = vld [vmem:[#allocation12 + $0x1d8] sm:$0xff]
          %v963 = vld [vmem:[#allocation12 + $0x1e0] sm:$0xff]
          %v964 = vld [vmem:[#allocation12 + $0x1e8] sm:$0xff]
          %v965 = vld [vmem:[#allocation12 + $0x1f0] sm:$0xff]
          %v966 = vld [vmem:[#allocation12 + $0x1f8] sm:$0xff]
          %v967 = vld [vmem:[#allocation12 + $0x200] sm:$0xff]
          %v968 = vld [vmem:[#allocation12 + $0x208] sm:$0xff]
          %v969 = vld [vmem:[#allocation12 + $0x210] sm:$0xff]
          %v970 = vld [vmem:[#allocation12 + $0x218] sm:$0xff]
          %v971 = vld [vmem:[#allocation12 + $0x220] sm:$0xff]
          %v972 = vld [vmem:[#allocation12 + $0x228] sm:$0xff]
          %v973 = vld [vmem:[#allocation12 + $0x230] sm:$0xff]
          %v974 = vld [vmem:[#allocation12 + $0x238] sm:$0xff]
          %v975 = vld [vmem:[#allocation12 + $0x240] sm:$0xff]
          %v976 = vld [vmem:[#allocation12 + $0x248] sm:$0xff]
          %v977 = vld [vmem:[#allocation12 + $0x250] sm:$0xff]
          %v978 = vld [vmem:[#allocation12 + $0x258] sm:$0xff]
          %v979 = vld [vmem:[#allocation12 + $0x260] sm:$0xff]
          %v980 = vld [vmem:[#allocation12 + $0x268] sm:$0xff]
          %v981 = vld [vmem:[#allocation12 + $0x270] sm:$0xff]
          %v982 = vld [vmem:[#allocation12 + $0x278] sm:$0xff]
          %v983 = vld [vmem:[#allocation12 + $0x280] sm:$0xff]
          %v984 = vld [vmem:[#allocation12 + $0x288] sm:$0xff]
          %v985 = vld [vmem:[#allocation12 + $0x290] sm:$0xff]
          %v986 = vld [vmem:[#allocation12 + $0x298] sm:$0xff]
          %v987 = vld [vmem:[#allocation12 + $0x2a0] sm:$0xff]
          %v988 = vld [vmem:[#allocation12 + $0x2a8] sm:$0xff]
          %v989 = vld [vmem:[#allocation12 + $0x2b0] sm:$0xff]
          %v990 = vld [vmem:[#allocation12 + $0x2b8] sm:$0xff]
          %v991 = vld [vmem:[#allocation12 + $0x2c0] sm:$0xff]
          %v992 = vld [vmem:[#allocation12 + $0x2c8] sm:$0xff]
          %v993 = vld [vmem:[#allocation12 + $0x2d0] sm:$0xff]
          %v994 = vld [vmem:[#allocation12 + $0x2d8] sm:$0xff]
          %v995 = vld [vmem:[#allocation12 + $0x2e0] sm:$0xff]
          %v996 = vld [vmem:[#allocation12 + $0x2e8] sm:$0xff]
          %v997 = vld [vmem:[#allocation12 + $0x2f0] sm:$0xff]
          %v998 = vld [vmem:[#allocation12 + $0x2f8] sm:$0xff]
          %v999 = vld [vmem:[#allocation12 + $0x300] sm:$0xff]
          %v1000 = vld [vmem:[#allocation12 + $0x308] sm:$0xff]
          %v1001 = vld [vmem:[#allocation12 + $0x310] sm:$0xff]
          %v1002 = vld [vmem:[#allocation12 + $0x318] sm:$0xff]
          %v1003 = vld [vmem:[#allocation12 + $0x320] sm:$0xff]
          %v1004 = vld [vmem:[#allocation12 + $0x328] sm:$0xff]
          %v1005 = vld [vmem:[#allocation12 + $0x330] sm:$0xff]
          %v1006 = vld [vmem:[#allocation12 + $0x338] sm:$0xff]
          %v1007 = vld [vmem:[#allocation12 + $0x340] sm:$0xff]
          %v1008 = vld [vmem:[#allocation12 + $0x348] sm:$0xff]
          %v1009 = vld [vmem:[#allocation12 + $0x350] sm:$0xff]
          %v1010 = vld [vmem:[#allocation12 + $0x358] sm:$0xff]
          %v1011 = vld [vmem:[#allocation12 + $0x360] sm:$0xff]
          %v1012 = vld [vmem:[#allocation12 + $0x368] sm:$0xff]
          %v1013 = vld [vmem:[#allocation12 + $0x370] sm:$0xff]
          %v1014 = vld [vmem:[#allocation12 + $0x378] sm:$0xff]
          %v1015 = vld [vmem:[#allocation12 + $0x380] sm:$0xff]
          %v1016 = vld [vmem:[#allocation12 + $0x388] sm:$0xff]
          %v1017 = vld [vmem:[#allocation12 + $0x390] sm:$0xff]
          %v1018 = vld [vmem:[#allocation12 + $0x398] sm:$0xff]
          %v1019 = vld [vmem:[#allocation12 + $0x3a0] sm:$0xff]
          %v1020 = vld [vmem:[#allocation12 + $0x3a8] sm:$0xff]
          %v1021 = vld [vmem:[#allocation12 + $0x3b0] sm:$0xff]
          %v1022 = vld [vmem:[#allocation12 + $0x3b8] sm:$0xff]
          %v1023 = vld [vmem:[#allocation12 + $0x3c0] sm:$0xff]
          %v1024 = vld [vmem:[#allocation12 + $0x3c8] sm:$0xff]
          %v1025 = vld [vmem:[#allocation12 + $0x3d0] sm:$0xff]
          %v1026 = vld [vmem:[#allocation12 + $0x3d8] sm:$0xff]
          %v1027 = vld [vmem:[#allocation12 + $0x3e0] sm:$0xff]
          %v1028 = vld [vmem:[#allocation12 + $0x3e8] sm:$0xff]
          %v1029 = vld [vmem:[#allocation12 + $0x3f0] sm:$0xff]
          %v1030 = vld [vmem:[#allocation12 + $0x3f8] sm:$0xff]
          %v1031 = vld [vmem:[%s11] sm:$0x3]
          %v1033 = vperm.slane %v1031, 0
          %v1034 = vperm.slane %v1031, 1
          %1037 = vmatpush.msra.mxu0 %v933
          %1038 = vmatpush.msra.mxu0 %v931
          %1039 = vmatpush.msra.mxu0 %v929
          %1040 = vmatpush.msra.mxu0 %v927
          %1041 = vmatpush.msra.mxu0 %v925
          %1042 = vmatpush.msra.mxu0 %v923
          %1043 = vmatpush.msra.mxu0 %v921
          %1044 = vmatpush.msra.mxu0 %v919
          %1045 = vmatpush.msra.mxu0 %v917
          %1046 = vmatpush.msra.mxu0 %v915
          %1047 = vmatpush.msra.mxu0 %v913
          %1048 = vmatpush.msra.mxu0 %v911
          %1049 = vmatpush.msra.mxu0 %v909
          %1050 = vmatpush.msra.mxu0 %v907
          %1051 = vmatpush.msra.mxu0 %v905
          %1052 = vmatpush.msra.mxu0 %v903
          %1053 = vmatmul.f32.gmra.mxu0 %v899
          %v1054 = vpop.f32.mrf.mxu0
          %v1055 = vadd.f32 %v1033, %v1054
          %1056 = vdwg.mxu0
          %1057 = vmatpush.msra.mxu0 %v965
          %1058 = vmatpush.msra.mxu0 %v963
          %1059 = vmatpush.msra.mxu0 %v961
          %1060 = vmatpush.msra.mxu0 %v959
          %1061 = vmatpush.msra.mxu0 %v957
          %1062 = vmatpush.msra.mxu0 %v955
          %1063 = vmatpush.msra.mxu0 %v953
          %1064 = vmatpush.msra.mxu0 %v951
          %1065 = vmatpush.msra.mxu0 %v949
          %1066 = vmatpush.msra.mxu0 %v947
          %1067 = vmatpush.msra.mxu0 %v945
          %1068 = vmatpush.msra.mxu0 %v943
          %1069 = vmatpush.msra.mxu0 %v941
          %1070 = vmatpush.msra.mxu0 %v939
          %1071 = vmatpush.msra.mxu0 %v937
          %1072 = vmatpush.msra.mxu0 %v935
          %1073 = vmatmul.f32.gmra.mxu0 %v900
          %v1074 = vpop.f32.mrf.mxu0
          %v1075 = vadd.f32 %v1055, %v1074
          %1076 = vdwg.mxu0
          %1077 = vmatpush.msra.mxu0 %v997
          %1078 = vmatpush.msra.mxu0 %v995
          %1079 = vmatpush.msra.mxu0 %v993
          %1080 = vmatpush.msra.mxu0 %v991
          %1081 = vmatpush.msra.mxu0 %v989
          %1082 = vmatpush.msra.mxu0 %v987
          %1083 = vmatpush.msra.mxu0 %v985
          %1084 = vmatpush.msra.mxu0 %v983
          %1085 = vmatpush.msra.mxu0 %v981
          %1086 = vmatpush.msra.mxu0 %v979
          %1087 = vmatpush.msra.mxu0 %v977
          %1088 = vmatpush.msra.mxu0 %v975
          %1089 = vmatpush.msra.mxu0 %v973
          %1090 = vmatpush.msra.mxu0 %v971
          %1091 = vmatpush.msra.mxu0 %v969
          %1092 = vmatpush.msra.mxu0 %v967
          %1093 = vmatmul.f32.gmra.mxu0 %v901
          %v1094 = vpop.f32.mrf.mxu0
          %v1095 = vadd.f32 %v1075, %v1094
          %1096 = vdwg.mxu0
          %1097 = vmatpush.msra.mxu0 %v1029
          %1098 = vmatpush.msra.mxu0 %v1027
          %1099 = vmatpush.msra.mxu0 %v1025
          %1100 = vmatpush.msra.mxu0 %v1023
          %1101 = vmatpush.msra.mxu0 %v1021
          %1102 = vmatpush.msra.mxu0 %v1019
          %1103 = vmatpush.msra.mxu0 %v1017
          %1104 = vmatpush.msra.mxu0 %v1015
          %1105 = vmatpush.msra.mxu0 %v1013
          %1106 = vmatpush.msra.mxu0 %v1011
          %1107 = vmatpush.msra.mxu0 %v1009
          %1108 = vmatpush.msra.mxu0 %v1007
          %1109 = vmatpush.msra.mxu0 %v1005
          %1110 = vmatpush.msra.mxu0 %v1003
          %1111 = vmatpush.msra.mxu0 %v1001
          %1112 = vmatpush.msra.mxu0 %v999
          %1113 = vmatmul.f32.gmra.mxu0 %v902
          %v1114 = vpop.f32.mrf.mxu0
          %v1115 = vadd.f32 %v1095, %v1114
          %1116 = vdwg.mxu0
          %1117 = vmatpush.msra.mxu0 %v934
          %1118 = vmatpush.msra.mxu0 %v932
          %1119 = vmatpush.msra.mxu0 %v930
          %1120 = vmatpush.msra.mxu0 %v928
          %1121 = vmatpush.msra.mxu0 %v926
          %1122 = vmatpush.msra.mxu0 %v924
          %1123 = vmatpush.msra.mxu0 %v922
          %1124 = vmatpush.msra.mxu0 %v920
          %1125 = vmatpush.msra.mxu0 %v918
          %1126 = vmatpush.msra.mxu0 %v916
          %1127 = vmatpush.msra.mxu0 %v914
          %1128 = vmatpush.msra.mxu0 %v912
          %1129 = vmatpush.msra.mxu0 %v910
          %1130 = vmatpush.msra.mxu0 %v908
          %1131 = vmatpush.msra.mxu0 %v906
          %1132 = vmatpush.msra.mxu0 %v904
          %1133 = vmatmul.f32.gmra.mxu0 %v899
          %v1134 = vpop.f32.mrf.mxu0
          %v1135 = vadd.f32 %v1034, %v1134
          %1136 = vdwg.mxu0
          %1137 = vmatpush.msra.mxu0 %v966
          %1138 = vmatpush.msra.mxu0 %v964
          %1139 = vmatpush.msra.mxu0 %v962
          %1140 = vmatpush.msra.mxu0 %v960
          %1141 = vmatpush.msra.mxu0 %v958
          %1142 = vmatpush.msra.mxu0 %v956
          %1143 = vmatpush.msra.mxu0 %v954
          %1144 = vmatpush.msra.mxu0 %v952
          %1145 = vmatpush.msra.mxu0 %v950
          %1146 = vmatpush.msra.mxu0 %v948
          %1147 = vmatpush.msra.mxu0 %v946
          %1148 = vmatpush.msra.mxu0 %v944
          %1149 = vmatpush.msra.mxu0 %v942
          %1150 = vmatpush.msra.mxu0 %v940
          %1151 = vmatpush.msra.mxu0 %v938
          %1152 = vmatpush.msra.mxu0 %v936
          %1153 = vmatmul.f32.gmra.mxu0 %v900
          %v1154 = vpop.f32.mrf.mxu0
          %v1155 = vadd.f32 %v1135, %v1154
          %1156 = vdwg.mxu0
          %1157 = vmatpush.msra.mxu0 %v998
          %1158 = vmatpush.msra.mxu0 %v996
          %1159 = vmatpush.msra.mxu0 %v994
          %1160 = vmatpush.msra.mxu0 %v992
          %1161 = vmatpush.msra.mxu0 %v990
          %1162 = vmatpush.msra.mxu0 %v988
          %1163 = vmatpush.msra.mxu0 %v986
          %1164 = vmatpush.msra.mxu0 %v984
          %1165 = vmatpush.msra.mxu0 %v982
          %1166 = vmatpush.msra.mxu0 %v980
          %1167 = vmatpush.msra.mxu0 %v978
          %1168 = vmatpush.msra.mxu0 %v976
          %1169 = vmatpush.msra.mxu0 %v974
          %1170 = vmatpush.msra.mxu0 %v972
          %1171 = vmatpush.msra.mxu0 %v970
          %1172 = vmatpush.msra.mxu0 %v968
          %1173 = vmatmul.f32.gmra.mxu0 %v901
          %v1174 = vpop.f32.mrf.mxu0
          %v1175 = vadd.f32 %v1155, %v1174
          %1176 = vdwg.mxu0
          %1177 = vmatpush.msra.mxu0 %v1030
          %1178 = vmatpush.msra.mxu0 %v1028
          %1179 = vmatpush.msra.mxu0 %v1026
          %1180 = vmatpush.msra.mxu0 %v1024
          %1181 = vmatpush.msra.mxu0 %v1022
          %1182 = vmatpush.msra.mxu0 %v1020
          %1183 = vmatpush.msra.mxu0 %v1018
          %1184 = vmatpush.msra.mxu0 %v1016
          %1185 = vmatpush.msra.mxu0 %v1014
          %1186 = vmatpush.msra.mxu0 %v1012
          %1187 = vmatpush.msra.mxu0 %v1010
          %1188 = vmatpush.msra.mxu0 %v1008
          %1189 = vmatpush.msra.mxu0 %v1006
          %1190 = vmatpush.msra.mxu0 %v1004
          %1191 = vmatpush.msra.mxu0 %v1002
          %1192 = vmatpush.msra.mxu0 %v1000
          %1193 = vmatmul.f32.gmra.mxu0 %v902
          %v1194 = vpop.f32.mrf.mxu0
          %v1195 = vadd.f32 %v1175, %v1194
          %1196 = vdwg.mxu0
          %v1197 = vld [vmem:[%s12] sm:$0x3]
          %v1199 = vperm.slane %v1197, 0
          %v1200 = vperm.slane %v1197, 1
          %v1203 = vmul.f32 %v1115, %v1199
          %v1204 = vmul.f32 %v1195, %v1200
          %v1205 = vld [vmem:[%s13] sm:$0x3]
          %v1207 = vperm.slane %v1205, 0
          %v1208 = vperm.slane %v1205, 1
          %v1211 = vadd.f32 %v1203, %v1207
          %v1212 = vadd.f32 %v1204, %v1208
          %v1213 = vmax.f32 %v1211, 0.0
          %v1214 = vmax.f32 %v1212, 0.0
          %v1215 = vld [vmem:[#allocation14] sm:$0xff]
          %v1216 = vld [vmem:[#allocation14 + $0x8] sm:$0xff]
          %v1217 = vld [vmem:[#allocation14 + $0x10] sm:$0xff]
          %v1218 = vld [vmem:[#allocation14 + $0x18] sm:$0xff]
          %v1219 = vld [vmem:[#allocation15] sm:$0xff]
          %v1220 = vld [vmem:[#allocation15 + $0x8] sm:$0xff]
          %v1221 = vld [vmem:[#allocation15 + $0x10] sm:$0xff]
          %v1222 = vld [vmem:[#allocation15 + $0x18] sm:$0xff]
          %v1223 = vld [vmem:[#allocation15 + $0x20] sm:$0xff]
          %v1224 = vld [vmem:[#allocation15 + $0x28] sm:$0xff]
          %v1225 = vld [vmem:[#allocation15 + $0x30] sm:$0xff]
          %v1226 = vld [vmem:[#allocation15 + $0x38] sm:$0xff]
          %v1227 = vld [vmem:[#allocation15 + $0x40] sm:$0xff]
          %v1228 = vld [vmem:[#allocation15 + $0x48] sm:$0xff]
          %v1229 = vld [vmem:[#allocation15 + $0x50] sm:$0xff]
          %v1230 = vld [vmem:[#allocation15 + $0x58] sm:$0xff]
          %v1231 = vld [vmem:[#allocation15 + $0x60] sm:$0xff]
          %v1232 = vld [vmem:[#allocation15 + $0x68] sm:$0xff]
          %v1233 = vld [vmem:[#allocation15 + $0x70] sm:$0xff]
          %v1234 = vld [vmem:[#allocation15 + $0x78] sm:$0xff]
          %v1235 = vld [vmem:[#allocation15 + $0x80] sm:$0xff]
          %v1236 = vld [vmem:[#allocation15 + $0x88] sm:$0xff]
          %v1237 = vld [vmem:[#allocation15 + $0x90] sm:$0xff]
          %v1238 = vld [vmem:[#allocation15 + $0x98] sm:$0xff]
          %v1239 = vld [vmem:[#allocation15 + $0xa0] sm:$0xff]
          %v1240 = vld [vmem:[#allocation15 + $0xa8] sm:$0xff]
          %v1241 = vld [vmem:[#allocation15 + $0xb0] sm:$0xff]
          %v1242 = vld [vmem:[#allocation15 + $0xb8] sm:$0xff]
          %v1243 = vld [vmem:[#allocation15 + $0xc0] sm:$0xff]
          %v1244 = vld [vmem:[#allocation15 + $0xc8] sm:$0xff]
          %v1245 = vld [vmem:[#allocation15 + $0xd0] sm:$0xff]
          %v1246 = vld [vmem:[#allocation15 + $0xd8] sm:$0xff]
          %v1247 = vld [vmem:[#allocation15 + $0xe0] sm:$0xff]
          %v1248 = vld [vmem:[#allocation15 + $0xe8] sm:$0xff]
          %v1249 = vld [vmem:[#allocation15 + $0xf0] sm:$0xff]
          %v1250 = vld [vmem:[#allocation15 + $0xf8] sm:$0xff]
          %1251 = vmatpush.msra.mxu0 %v1234
          %1252 = vmatpush.msra.mxu0 %v1233
          %1253 = vmatpush.msra.mxu0 %v1232
          %1254 = vmatpush.msra.mxu0 %v1231
          %1255 = vmatpush.msra.mxu0 %v1230
          %1256 = vmatpush.msra.mxu0 %v1229
          %1257 = vmatpush.msra.mxu0 %v1228
          %1258 = vmatpush.msra.mxu0 %v1227
          %1259 = vmatpush.msra.mxu0 %v1226
          %1260 = vmatpush.msra.mxu0 %v1225
          %1261 = vmatpush.msra.mxu0 %v1224
          %1262 = vmatpush.msra.mxu0 %v1223
          %1263 = vmatpush.msra.mxu0 %v1222
          %1264 = vmatpush.msra.mxu0 %v1221
          %1265 = vmatpush.msra.mxu0 %v1220
          %1266 = vmatpush.msra.mxu0 %v1219
          %1267 = vmatmul.f32.gmra.mxu0 %v1213
          %v1268 = vpop.f32.mrf.mxu0
          %v1269 = vadd.f32 0.0, %v1268
          %1270 = vdwg.mxu0
          %1271 = vmatpush.msra.mxu0 %v1250
          %1272 = vmatpush.msra.mxu0 %v1249
          %1273 = vmatpush.msra.mxu0 %v1248
          %1274 = vmatpush.msra.mxu0 %v1247
          %1275 = vmatpush.msra.mxu0 %v1246
          %1276 = vmatpush.msra.mxu0 %v1245
          %1277 = vmatpush.msra.mxu0 %v1244
          %1278 = vmatpush.msra.mxu0 %v1243
          %1279 = vmatpush.msra.mxu0 %v1242
          %1280 = vmatpush.msra.mxu0 %v1241
          %1281 = vmatpush.msra.mxu0 %v1240
          %1282 = vmatpush.msra.mxu0 %v1239
          %1283 = vmatpush.msra.mxu0 %v1238
          %1284 = vmatpush.msra.mxu0 %v1237
          %1285 = vmatpush.msra.mxu0 %v1236
          %1286 = vmatpush.msra.mxu0 %v1235
          %1287 = vmatmul.f32.gmra.mxu0 %v1214
          %v1288 = vpop.f32.mrf.mxu0
          %v1289 = vadd.f32 %v1269, %v1288
          %1290 = vdwg.mxu0
          %vm1291 = vcmask 261120
          %v1293 = vsel %vm1291, %v771, 0
          %1295 = vmatpush.msra.mxu0 0.0
          %1296 = vmatpush.msra.mxu0 0.0
          %1297 = vmatpush.msra.mxu0 0.0
          %1298 = vmatpush.msra.mxu0 0.0
          %1299 = vmatpush.msra.mxu0 0.0
          %1300 = vmatpush.msra.mxu0 0.0
          %1301 = vmatpush.msra.mxu0 0.0
          %1302 = vmatpush.msra.mxu0 0.0
          %1303 = vmatpush.msra.mxu0 0.0
          %1304 = vmatpush.msra.mxu0 0.0
          %1305 = vmatpush.msra.mxu0 0.0
          %1306 = vmatpush.msra.mxu0 0.0
          %1307 = vmatpush.msra.mxu0 %v1218
          %1308 = vmatpush.msra.mxu0 %v1217
          %1309 = vmatpush.msra.mxu0 %v1216
          %1310 = vmatpush.msra.mxu0 %v1215
          %1311 = vmatmul.f32.gmra.mxu0 %v1293
          %v1312 = vpop.f32.mrf.mxu0
          %v1313 = vadd.f32 %v1289, %v1312
          %1314 = vdwg.mxu0
          %v1315 = vld [vmem:[%s16] sm:$0x1]
          %v1317 = vperm.slane %v1315, 0
          %v1319 = vadd.f32 %v1313, %v1317
          %1320 = vst [vmem:[#allocation17] sm:$0x3] %v1319
        $region128: #{tpu_custom_call.1} parent=87 // pred_fallthru
          _
        // Predicated region
        $region129: #{tpu_custom_call.1} parent=87 // pred_check
          %p1321 = pneg %p435
        $region130: #{tpu_custom_call.1} parent=87 // pred_check_branch
          %1323 = sbr.rel (%p1321) target = $region132
        $region131: #{tpu_custom_call.1} parent=87 // pred_region
          %1325 = vsyncadd [#allocation5], 0
          %s1326 = smul.addr %s40, 2
          %s1327 = scalar_lea.hbm %s17, %s1326
          %s1329 = sshll.u32 [#allocation17], 4
          %s1330 = int_to_ptr.vmem [resolvable:$true] %s1329
          %s1331 = sshll.u32 %s1327, 4
          %s1332 = int_to_ptr.hbm [resolvable:$true] %s1331
          %1334 = dma.vmem_to_hbm [thread:$0]  %s1330, 32, %s1332, [#allocation5]
        $region132: #{tpu_custom_call.1} parent=87 // pred_fallthru
          _
        // Predicated region
        $region133: #{tpu_custom_call.1} parent=87 // pred_check
          %p1335 = pneg %p435
        $region134: #{tpu_custom_call.1} parent=87 // pred_check_branch
          %1337 = sbr.rel (%p1335) target = $region136
        $region135: #{tpu_custom_call.1} parent=87 // pred_region
          %1339 = dma.done [#allocation5], 32
        $region136: #{tpu_custom_call.1} parent=87 // pred_fallthru
          _
      $region88: #{tpu_custom_call.1} parent=5 // pred_fallthru
        _
      %p1340 = scmp.le.s32.totalorder 2, %s31
      // Predicated region
      $region137: #{tpu_custom_call.1} parent=5 // pred_check
        %p1341 = pneg %p1340
      $region138: #{tpu_custom_call.1} parent=5 // pred_check_branch
        %1343 = sbr.rel (%p1341) target = $region140
      $region139: #{tpu_custom_call.1} parent=5 // pred_region
        %s1344 = ssub.s32 %s31, 2
      $region140: #{tpu_custom_call.1} parent=5 // pred_fallthru
        _
    $region6: #{tpu_custom_call.1} parent=1 // loop_footer
      %s35 = sadd.s32 1, %s31
    $region7: #{tpu_custom_call.1} parent=1 // loop_footer_branch
      %30 = sbr.rel target = $region3
    $region8: #{tpu_custom_call.1} parent=1 // loop_exit
      _
    %1345 = vsyncpa [#allocation4], 1
    %s1346 = scalar_lea.sflag [#allocation4], 1
    %1347 = vsyncpa %s1346, 1
    %1348 = vsyncpa [#allocation7], 1
    %1349 = vsyncpa [#allocation10], 1
    %1350 = vsyncpa [#allocation13], 1
    %1351 = vsyncpa [#allocation16], 1
    %1352 = vsyncpa [#allocation5], 1
    %s1353 = scalar_lea.sflag [#allocation5], 1
    %1354 = vsyncpa %s1353, 1

</llo_original>
